<compile_context>
chip_gen: v6e
topology: v6e:2x2x1
jax: 0.10.0
libtpu: 0.0.40
codegen_flags: <defaults>
</compile_context>

<pallas_src>
import functools

import jax
import jax.numpy as jnp
from jax.experimental import pallas as pl
from jax.experimental.pallas import tpu as pltpu


def _lstm2_fused_kernel(mask_ref, x_ref,
                        wih0_ref, whh0_ref, b0_ref,
                        w1_ref, b1_ref,
                        out_ref, g0_ref,
                        *, hidden_size, seq_len, tile_b):
    """Two-layer LSTM (wavefront-fused) over one batch tile; writes hn[-1] for the tile.

    mask_ref : (T*TB, 1) f32   1.0 while t < length[b], 0.0 after (rows are (t, b)-major)
    x_ref    : (T*TB, E) bf16  time-major embeddings for this batch tile
    wih0_ref : (E, 4H)   bf16  layer-0 input->gates weights, columns reordered [i,f,o,g]
    whh0_ref : (H, 4H)   bf16  layer-0 hidden->gates weights, reordered
    b0_ref   : (1, 4H)   f32   layer-0 combined bias (b_ih + b_hh), reordered
    w1_ref   : (2H, 4H)  bf16  layer-1 combined [W_ih1; W_hh1], reordered
    b1_ref   : (1, 4H)   f32   layer-1 combined bias, reordered
    out_ref  : (TB, H)   f32   hn[-1] for this tile
    g0_ref   : (T*TB,4H) f32   scratch: bulk layer-0 input->gate projection
    """
    H, T, TB = hidden_size, seq_len, tile_b
    H3 = 3 * H

    # Hoisted loads (off the per-step critical path).
    whh0 = whh0_ref[...]                      # (H, 4H)  bf16
    w1 = w1_ref[...]                          # (2H, 4H) bf16
    b1 = b1_ref[...]                          # (1, 4H)  f32

    # Bulk layer-0 input->gate projection: one dense MXU matmul, bias folded, into VMEM scratch.
    g0_ref[...] = jnp.dot(x_ref[...], wih0_ref[...],
                          preferred_element_type=jnp.float32) + b0_ref[...]

    # Hoisted mask: one compare + one lane broadcast for the whole sequence.
    m_all = jnp.broadcast_to(mask_ref[...] > 0.0, (T * TB, H))          # (T*TB, H) bool

    def cell(gates, h_prev, c_prev, m):
        """Gate order [i, f, o | g]; freeze state where m is False."""
        sig = jax.nn.sigmoid(gates[:, :H3])              # one contiguous EUP pass (i,f,o)
        i_g = sig[:, 0:H]
        f_g = sig[:, H:2 * H]
        o_g = sig[:, 2 * H:H3]
        g_g = jnp.tanh(gates[:, H3:])
        c_new = f_g * c_prev + i_g * g_g
        h_new = o_g * jnp.tanh(c_new)
        return jnp.where(m, h_new, h_prev), jnp.where(m, c_new, c_prev)

    zeros = jnp.zeros((TB, H), jnp.float32)
    h0, c0 = zeros, zeros
    h1, c1 = zeros, zeros
    h0_prev = zeros        # layer-0 output produced in the previous wavefront iteration

    # Wavefront: iteration k runs layer-0 step k and layer-1 step k-1 (T+1 iterations total).
    # The two matmuls inside an iteration have no data dependence on each other.
    # T is small & static here -> unrolled Python loop with static slices only.
    for k in range(T + 1):
        if k >= 1:
            r1 = (k - 1) * TB
            hx = jnp.concatenate([h0_prev, h1], axis=1).astype(jnp.bfloat16)   # (TB, 2H)
            g1 = jnp.dot(hx, w1, preferred_element_type=jnp.float32) + b1      # (TB, 4H)
            h1, c1 = cell(g1, h1, c1, m_all[r1:r1 + TB, :])
        if k < T:
            r0 = k * TB
            g0 = g0_ref[r0:r0 + TB, :] + jnp.dot(
                h0.astype(jnp.bfloat16), whh0, preferred_element_type=jnp.float32)
            h0, c0 = cell(g0, h0, c0, m_all[r0:r0 + TB, :])
            h0_prev = h0   # consumed by layer-1 in iteration k+1

    out_ref[...] = h1


def _reorder_gate_cols(w_t, H):
    """(in, 4H) with column blocks [i,f,g,o] -> [i,f,o,g]."""
    in_dim = w_t.shape[0]
    return w_t.reshape(in_dim, 4, H)[:, jnp.array([0, 1, 3, 2]), :].reshape(in_dim, 4 * H)


def question_encoder_forward(embeddings, lengths, params, hidden_size):
    """embeddings: (B, T, E) f32 batch-first; lengths: (B,) int32 (sorted descending)."""
    B, T, E = embeddings.shape
    H = hidden_size

    # Pad batch to a sublane multiple; padded rows carry length 0 (state frozen at zero).
    TB = max(8, int(pl.cdiv(B, 8)) * 8) if B <= 8 else 8 * int(pl.cdiv(B, 8))
    TB = min(TB, 8 * int(pl.cdiv(B, 8)))          # smallest multiple of 8 covering B
    B_pad = TB * int(pl.cdiv(B, TB))
    nb = B_pad // TB                               # == 1 at these test shapes

    # --- glue (plain JAX): layout + parameter prep -------------------------------------------
    emb_p = jnp.zeros((B_pad, T, E), embeddings.dtype).at[:B].set(embeddings)
    len_p = jnp.zeros((B_pad,), jnp.int32).at[:B].set(lengths.astype(jnp.int32))

    # Rows within a batch tile are (t, b)-major so each timestep is TB contiguous rows.
    x = emb_p.astype(jnp.bfloat16)
    x_tiles = x.reshape(nb, TB, T, E).transpose(0, 2, 1, 3).reshape(nb, T * TB, E)

    mask = (jnp.arange(T, dtype=jnp.int32)[:, None] < len_p[None, :]).astype(jnp.float32)  # (T,B_pad)
    mask_tiles = mask.reshape(T, nb, TB).transpose(1, 0, 2).reshape(nb, T * TB, 1)

    # Weights pre-transposed to (in, 4H), gate columns reordered [i,f,o,g], bf16 operands.
    wih0 = _reorder_gate_cols(params["w_ih_l0"].T, H).astype(jnp.bfloat16)   # (E, 4H)
    whh0 = _reorder_gate_cols(params["w_hh_l0"].T, H).astype(jnp.bfloat16)   # (H, 4H)
    b0 = _reorder_gate_cols((params["b_ih_l0"] + params["b_hh_l0"]).reshape(1, 4 * H), H
                            ).astype(jnp.float32)                            # (1, 4H)
    wih1 = _reorder_gate_cols(params["w_ih_l1"].T, H)                        # (H, 4H)
    whh1 = _reorder_gate_cols(params["w_hh_l1"].T, H)                        # (H, 4H)
    w1 = jnp.concatenate([wih1, whh1], axis=0).astype(jnp.bfloat16)          # (2H, 4H)
    b1 = _reorder_gate_cols((params["b_ih_l1"] + params["b_hh_l1"]).reshape(1, 4 * H), H
                            ).astype(jnp.float32)                            # (1, 4H)

    kernel = functools.partial(_lstm2_fused_kernel, hidden_size=H, seq_len=T, tile_b=TB)
    out = pl.pallas_call(
        kernel,
        out_shape=jax.ShapeDtypeStruct((B_pad, H), jnp.float32),
        grid=(nb,),
        in_specs=[
            pl.BlockSpec((None, T * TB, 1), lambda ib: (ib, 0, 0)),    # masks
            pl.BlockSpec((None, T * TB, E), lambda ib: (ib, 0, 0)),    # embeddings (t-major)
            pl.BlockSpec((E, 4 * H), lambda ib: (0, 0)),               # W_ih layer 0
            pl.BlockSpec((H, 4 * H), lambda ib: (0, 0)),               # W_hh layer 0
            pl.BlockSpec((1, 4 * H), lambda ib: (0, 0)),               # bias layer 0
            pl.BlockSpec((2 * H, 4 * H), lambda ib: (0, 0)),           # [W_ih1; W_hh1]
            pl.BlockSpec((1, 4 * H), lambda ib: (0, 0)),               # bias layer 1
        ],
        out_specs=pl.BlockSpec((TB, H), lambda ib: (ib, 0)),
        scratch_shapes=[pltpu.VMEM((T * TB, 4 * H), jnp.float32)],     # layer-0 bulk gates
        compiler_params=pltpu.CompilerParams(dimension_semantics=("parallel",)),
    )(mask_tiles, x_tiles, wih0, whh0, b0, w1, b1)
    return out[:B]


def _lstm_reference(embeddings, lengths, params, H, num_layers):
    """Pure-JAX reference replicating PyTorch packed-LSTM hn[-1] (eval mode).

    Matmul operands are cast to bf16 (f32 accumulation) exactly like the kernel, so the only
    deviation from the pure-f32 PyTorch forward is bf16 operand rounding on the MXU.
    """
    B, T, _ = embeddings.shape
    layer_in = embeddings.astype(jnp.float32)
    h = None
    for layer in range(num_layers):
        wih = params[f"w_ih_l{layer}"].T.astype(jnp.bfloat16)
        whh = params[f"w_hh_l{layer}"].T.astype(jnp.bfloat16)
        b = (params[f"b_ih_l{layer}"] + params[f"b_hh_l{layer}"]).astype(jnp.float32)
        h = jnp.zeros((B, H), jnp.float32)
        c = jnp.zeros((B, H), jnp.float32)
        outs = []
        for t in range(T):
            x_t = layer_in[:, t, :].astype(jnp.bfloat16)
            gates = (jnp.dot(x_t, wih, preferred_element_type=jnp.float32) + b
                     + jnp.dot(h.astype(jnp.bfloat16), whh, preferred_element_type=jnp.float32))
            i_g = jax.nn.sigmoid(gates[:, 0 * H:1 * H])
            f_g = jax.nn.sigmoid(gates[:, 1 * H:2 * H])
            g_g = jnp.tanh(gates[:, 2 * H:3 * H])
            o_g = jax.nn.sigmoid(gates[:, 3 * H:4 * H])
            c_new = f_g * c + i_g * g_g
            h_new = o_g * jnp.tanh(c_new)
            mask = (t < lengths)[:, None]
            c = jnp.where(mask, c_new, c)
            h = jnp.where(mask, h_new, h)
            outs.append(h)
        layer_in = jnp.stack(outs, axis=1)
    return h


def _init_params(key, E, H, num_layers):
    """Deterministic init mimicking PyTorch LSTM: U(-1/sqrt(H), 1/sqrt(H))."""
    params = {}
    bound = 1.0 / (H ** 0.5)
    for layer in range(num_layers):
        in_dim = E if layer == 0 else H
        key, k1, k2, k3, k4 = jax.random.split(key, 5)
        params[f"w_ih_l{layer}"] = jax.random.uniform(k1, (4 * H, in_dim), jnp.float32, -bound, bound)
        params[f"w_hh_l{layer}"] = jax.random.uniform(k2, (4 * H, H), jnp.float32, -bound, bound)
        params[f"b_ih_l{layer}"] = jax.random.uniform(k3, (4 * H,), jnp.float32, -bound, bound)
        params[f"b_hh_l{layer}"] = jax.random.uniform(k4, (4 * H,), jnp.float32, -bound, bound)
    return params


if __name__ == "__main__":
    B, T, E, H, NUM_LAYERS = 2, 8, 32, 32, 2

    key = jax.random.PRNGKey(0)
    key, k_emb = jax.random.split(key)
    embeddings = jax.random.normal(k_emb, (B, T, E), jnp.float32)
    lengths = jnp.array([8, 5], dtype=jnp.int32)  # sorted descending (enforce_sorted=True)

    params = _init_params(key, E, H, NUM_LAYERS)

    out = question_encoder_forward(embeddings, lengths, params, H)
    out = jax.block_until_ready(out)

    ref = _lstm_reference(embeddings, lengths, params, H, NUM_LAYERS)
    assert out.shape == (B, H)
    assert jnp.allclose(out, ref, rtol=1e-3, atol=1e-3), "kernel/reference mismatch"

    print("KERNEL_OK")
</pallas_src>

<mosaic_0001>
module attributes {stable_mosaic.version = 11 : i64} {
  func.func @_lstm2_fused_kernel(%arg0: i32, %arg1: memref<1x64x1xf32, #tpu.memory_space<vmem>>, %arg2: memref<1x64x32xbf16, #tpu.memory_space<vmem>>, %arg3: memref<32x128xbf16, #tpu.memory_space<vmem>>, %arg4: memref<32x128xbf16, #tpu.memory_space<vmem>>, %arg5: memref<1x128xf32, #tpu.memory_space<vmem>>, %arg6: memref<64x128xbf16, #tpu.memory_space<vmem>>, %arg7: memref<1x128xf32, #tpu.memory_space<vmem>>, %arg8: memref<8x32xf32, #tpu.memory_space<vmem>>, %arg9: memref<64x128xf32, #tpu.memory_space<vmem>>) attributes {dimension_semantics = [#tpu.dimension_semantics<parallel>], iteration_bounds = array<i64: 1>, scalar_prefetch = 0 : i64, scratch_operands = 1 : i64, tpu.core_type = #tpu.core_type<tc>, window_params = [{transform_indices = @transform_0, window_bounds = array<i64: 1, 64, 1>}, {transform_indices = @transform_1, window_bounds = array<i64: 1, 64, 32>}, {pipeline_mode = #tpu.pipeline_mode<synchronous>, transform_indices = @transform_2, window_bounds = array<i64: 32, 128>}, {pipeline_mode = #tpu.pipeline_mode<synchronous>, transform_indices = @transform_3, window_bounds = array<i64: 32, 128>}, {pipeline_mode = #tpu.pipeline_mode<synchronous>, transform_indices = @transform_4, window_bounds = array<i64: 1, 128>}, {pipeline_mode = #tpu.pipeline_mode<synchronous>, transform_indices = @transform_5, window_bounds = array<i64: 64, 128>}, {pipeline_mode = #tpu.pipeline_mode<synchronous>, transform_indices = @transform_6, window_bounds = array<i64: 1, 128>}, {transform_indices = @transform_7, window_bounds = array<i64: 8, 32>}]} {
    %c0 = arith.constant 0 : index
    %c0_0 = arith.constant 0 : index
    %0 = vector.load %arg4[%c0, %c0_0] : memref<32x128xbf16, #tpu.memory_space<vmem>>, vector<32x128xbf16>
    %c0_1 = arith.constant 0 : index
    %c0_2 = arith.constant 0 : index
    %1 = vector.load %arg6[%c0_1, %c0_2] : memref<64x128xbf16, #tpu.memory_space<vmem>>, vector<64x128xbf16>
    %c0_3 = arith.constant 0 : index
    %c0_4 = arith.constant 0 : index
    %2 = vector.load %arg7[%c0_3, %c0_4] : memref<1x128xf32, #tpu.memory_space<vmem>>, vector<1x128xf32>
    %c0_5 = arith.constant 0 : index
    %c0_6 = arith.constant 0 : index
    %c0_7 = arith.constant 0 : index
    %3 = vector.load %arg2[%c0_5, %c0_6, %c0_7] : memref<1x64x32xbf16, #tpu.memory_space<vmem>>, vector<1x64x32xbf16>
    %4 = vector.shape_cast %3 : vector<1x64x32xbf16> to vector<64x32xbf16>
    %c0_8 = arith.constant 0 : index
    %c0_9 = arith.constant 0 : index
    %5 = vector.load %arg3[%c0_8, %c0_9] : memref<32x128xbf16, #tpu.memory_space<vmem>>, vector<32x128xbf16>
    %cst = arith.constant dense<0.000000e+00> : vector<64x128xf32>
    %6 = tpu.matmul %4, %5, %cst {dimension_numbers = #tpu.dot_dimension_numbers<[1], [0], [0], [1], [0, 0, 1, 1], [], []>} : vector<64x32xbf16>, vector<32x128xbf16>, vector<64x128xf32> -> vector<64x128xf32>
    %c0_10 = arith.constant 0 : index
    %c0_11 = arith.constant 0 : index
    %7 = vector.load %arg5[%c0_10, %c0_11] : memref<1x128xf32, #tpu.memory_space<vmem>>, vector<1x128xf32>
    %8 = vector.broadcast %7 : vector<1x128xf32> to vector<64x128xf32>
    %9 = arith.addf %6, %8 : vector<64x128xf32>
    %c0_12 = arith.constant 0 : index
    %c0_13 = arith.constant 0 : index
    %10 = vector.load %arg9[%c0_12, %c0_13] : memref<64x128xf32, #tpu.memory_space<vmem>>, vector<64x128xf32>
    tpu.vector_store %arg9[%c0_12, %c0_13], %9 {strides = array<i32>} : memref<64x128xf32, #tpu.memory_space<vmem>>, vector<64x128xf32>,
    %c0_14 = arith.constant 0 : index
    %c0_15 = arith.constant 0 : index
    %c0_16 = arith.constant 0 : index
    %11 = vector.load %arg1[%c0_14, %c0_15, %c0_16] : memref<1x64x1xf32, #tpu.memory_space<vmem>>, vector<1x64x1xf32>
    %12 = vector.shape_cast %11 : vector<1x64x1xf32> to vector<64x1xf32>
    %cst_17 = arith.constant 0.000000e+00 : f32
    %13 = vector.broadcast %cst_17 : f32 to vector<64x1xf32>
    %14 = arith.cmpf ogt, %12, %13 : vector<64x1xf32>
    %15 = vector.shape_cast %14 : vector<64x1xi1> to vector<64x1xi1>
    %16 = vector.broadcast %15 : vector<64x1xi1> to vector<64x32xi1>
    %cst_18 = arith.constant 0.000000e+00 : f32
    %17 = vector.broadcast %cst_18 : f32 to vector<8x32xf32>
    %c0_19 = arith.constant 0 : index
    %c0_20 = arith.constant 0 : index
    %18 = vector.load %arg9[%c0_19, %c0_20] : memref<64x128xf32, #tpu.memory_space<vmem>>, vector<8x128xf32>
    %19 = arith.truncf %17 : vector<8x32xf32> to vector<8x32xbf16>
    %cst_21 = arith.constant dense<0.000000e+00> : vector<8x128xf32>
    %20 = tpu.matmul %19, %0, %cst_21 {dimension_numbers = #tpu.dot_dimension_numbers<[1], [0], [0], [1], [0, 0, 1, 1], [], []>} : vector<8x32xbf16>, vector<32x128xbf16>, vector<8x128xf32> -> vector<8x128xf32>
    %21 = arith.addf %18, %20 : vector<8x128xf32>
    %22 = vector.extract_strided_slice %16 {offsets = [0, 0], sizes = [8, 32], strides = [1, 1]} : vector<64x32xi1> to vector<8x32xi1>
    %23 = vector.extract_strided_slice %21 {offsets = [0, 0], sizes = [8, 96], strides = [1, 1]} : vector<8x128xf32> to vector<8x96xf32>
    %24 = arith.negf %23 : vector<8x96xf32>
    %25 = math.exp %24 : vector<8x96xf32>
    %cst_22 = arith.constant 1.000000e+00 : f32
    %26 = vector.broadcast %cst_22 : f32 to vector<8x96xf32>
    %27 = arith.addf %26, %25 : vector<8x96xf32>
    %28 = arith.divf %26, %27 : vector<8x96xf32>
    %29 = vector.extract_strided_slice %28 {offsets = [0, 0], sizes = [8, 32], strides = [1, 1]} : vector<8x96xf32> to vector<8x32xf32>
    %30 = vector.extract_strided_slice %28 {offsets = [0, 32], sizes = [8, 32], strides = [1, 1]} : vector<8x96xf32> to vector<8x32xf32>
    %31 = vector.extract_strided_slice %28 {offsets = [0, 64], sizes = [8, 32], strides = [1, 1]} : vector<8x96xf32> to vector<8x32xf32>
    %32 = vector.extract_strided_slice %21 {offsets = [0, 96], sizes = [8, 32], strides = [1, 1]} : vector<8x128xf32> to vector<8x32xf32>
    %33 = math.tanh %32 : vector<8x32xf32>
    %34 = arith.mulf %30, %17 : vector<8x32xf32>
    %35 = arith.mulf %29, %33 : vector<8x32xf32>
    %36 = arith.addf %34, %35 : vector<8x32xf32>
    %37 = math.tanh %36 : vector<8x32xf32>
    %38 = arith.mulf %31, %37 : vector<8x32xf32>
    %39 = arith.select %22, %38, %17 : vector<8x32xi1>, vector<8x32xf32>
    %40 = arith.select %22, %36, %17 : vector<8x32xi1>, vector<8x32xf32>
    %41 = tpu.concatenate %39, %17 in 1 : vector<8x32xf32>, vector<8x32xf32> -> vector<8x64xf32>
    %42 = arith.truncf %41 : vector<8x64xf32> to vector<8x64xbf16>
    %cst_23 = arith.constant dense<0.000000e+00> : vector<8x128xf32>
    %43 = tpu.matmul %42, %1, %cst_23 {dimension_numbers = #tpu.dot_dimension_numbers<[1], [0], [0], [1], [0, 0, 1, 1], [], []>} : vector<8x64xbf16>, vector<64x128xbf16>, vector<8x128xf32> -> vector<8x128xf32>
    %44 = vector.broadcast %2 : vector<1x128xf32> to vector<8x128xf32>
    %45 = arith.addf %43, %44 : vector<8x128xf32>
    %46 = vector.extract_strided_slice %16 {offsets = [0, 0], sizes = [8, 32], strides = [1, 1]} : vector<64x32xi1> to vector<8x32xi1>
    %47 = vector.extract_strided_slice %45 {offsets = [0, 0], sizes = [8, 96], strides = [1, 1]} : vector<8x128xf32> to vector<8x96xf32>
    %48 = arith.negf %47 : vector<8x96xf32>
    %49 = math.exp %48 : vector<8x96xf32>
    %cst_24 = arith.constant 1.000000e+00 : f32
    %50 = vector.broadcast %cst_24 : f32 to vector<8x96xf32>
    %51 = arith.addf %50, %49 : vector<8x96xf32>
    %52 = arith.divf %50, %51 : vector<8x96xf32>
    %53 = vector.extract_strided_slice %52 {offsets = [0, 0], sizes = [8, 32], strides = [1, 1]} : vector<8x96xf32> to vector<8x32xf32>
    %54 = vector.extract_strided_slice %52 {offsets = [0, 32], sizes = [8, 32], strides = [1, 1]} : vector<8x96xf32> to vector<8x32xf32>
    %55 = vector.extract_strided_slice %52 {offsets = [0, 64], sizes = [8, 32], strides = [1, 1]} : vector<8x96xf32> to vector<8x32xf32>
    %56 = vector.extract_strided_slice %45 {offsets = [0, 96], sizes = [8, 32], strides = [1, 1]} : vector<8x128xf32> to vector<8x32xf32>
    %57 = math.tanh %56 : vector<8x32xf32>
    %58 = arith.mulf %54, %17 : vector<8x32xf32>
    %59 = arith.mulf %53, %57 : vector<8x32xf32>
    %60 = arith.addf %58, %59 : vector<8x32xf32>
    %61 = math.tanh %60 : vector<8x32xf32>
    %62 = arith.mulf %55, %61 : vector<8x32xf32>
    %63 = arith.select %46, %62, %17 : vector<8x32xi1>, vector<8x32xf32>
    %64 = arith.select %46, %60, %17 : vector<8x32xi1>, vector<8x32xf32>
    %c8 = arith.constant 8 : index
    %c0_25 = arith.constant 0 : index
    %65 = vector.load %arg9[%c8, %c0_25] : memref<64x128xf32, #tpu.memory_space<vmem>>, vector<8x128xf32>
    %66 = arith.truncf %39 : vector<8x32xf32> to vector<8x32xbf16>
    %cst_26 = arith.constant dense<0.000000e+00> : vector<8x128xf32>
    %67 = tpu.matmul %66, %0, %cst_26 {dimension_numbers = #tpu.dot_dimension_numbers<[1], [0], [0], [1], [0, 0, 1, 1], [], []>} : vector<8x32xbf16>, vector<32x128xbf16>, vector<8x128xf32> -> vector<8x128xf32>
    %68 = arith.addf %65, %67 : vector<8x128xf32>
    %69 = vector.extract_strided_slice %16 {offsets = [8, 0], sizes = [8, 32], strides = [1, 1]} : vector<64x32xi1> to vector<8x32xi1>
    %70 = vector.extract_strided_slice %68 {offsets = [0, 0], sizes = [8, 96], strides = [1, 1]} : vector<8x128xf32> to vector<8x96xf32>
    %71 = arith.negf %70 : vector<8x96xf32>
    %72 = math.exp %71 : vector<8x96xf32>
    %cst_27 = arith.constant 1.000000e+00 : f32
    %73 = vector.broadcast %cst_27 : f32 to vector<8x96xf32>
    %74 = arith.addf %73, %72 : vector<8x96xf32>
    %75 = arith.divf %73, %74 : vector<8x96xf32>
    %76 = vector.extract_strided_slice %75 {offsets = [0, 0], sizes = [8, 32], strides = [1, 1]} : vector<8x96xf32> to vector<8x32xf32>
    %77 = vector.extract_strided_slice %75 {offsets = [0, 32], sizes = [8, 32], strides = [1, 1]} : vector<8x96xf32> to vector<8x32xf32>
    %78 = vector.extract_strided_slice %75 {offsets = [0, 64], sizes = [8, 32], strides = [1, 1]} : vector<8x96xf32> to vector<8x32xf32>
    %79 = vector.extract_strided_slice %68 {offsets = [0, 96], sizes = [8, 32], strides = [1, 1]} : vector<8x128xf32> to vector<8x32xf32>
    %80 = math.tanh %79 : vector<8x32xf32>
    %81 = arith.mulf %77, %40 : vector<8x32xf32>
    %82 = arith.mulf %76, %80 : vector<8x32xf32>
    %83 = arith.addf %81, %82 : vector<8x32xf32>
    %84 = math.tanh %83 : vector<8x32xf32>
    %85 = arith.mulf %78, %84 : vector<8x32xf32>
    %86 = arith.select %69, %85, %39 : vector<8x32xi1>, vector<8x32xf32>
    %87 = arith.select %69, %83, %40 : vector<8x32xi1>, vector<8x32xf32>
    %88 = tpu.concatenate %86, %63 in 1 : vector<8x32xf32>, vector<8x32xf32> -> vector<8x64xf32>
    %89 = arith.truncf %88 : vector<8x64xf32> to vector<8x64xbf16>
    %cst_28 = arith.constant dense<0.000000e+00> : vector<8x128xf32>
    %90 = tpu.matmul %89, %1, %cst_28 {dimension_numbers = #tpu.dot_dimension_numbers<[1], [0], [0], [1], [0, 0, 1, 1], [], []>} : vector<8x64xbf16>, vector<64x128xbf16>, vector<8x128xf32> -> vector<8x128xf32>
    %91 = vector.broadcast %2 : vector<1x128xf32> to vector<8x128xf32>
    %92 = arith.addf %90, %91 : vector<8x128xf32>
    %93 = vector.extract_strided_slice %16 {offsets = [8, 0], sizes = [8, 32], strides = [1, 1]} : vector<64x32xi1> to vector<8x32xi1>
    %94 = vector.extract_strided_slice %92 {offsets = [0, 0], sizes = [8, 96], strides = [1, 1]} : vector<8x128xf32> to vector<8x96xf32>
    %95 = arith.negf %94 : vector<8x96xf32>
    %96 = math.exp %95 : vector<8x96xf32>
    %cst_29 = arith.constant 1.000000e+00 : f32
    %97 = vector.broadcast %cst_29 : f32 to vector<8x96xf32>
    %98 = arith.addf %97, %96 : vector<8x96xf32>
    %99 = arith.divf %97, %98 : vector<8x96xf32>
    %100 = vector.extract_strided_slice %99 {offsets = [0, 0], sizes = [8, 32], strides = [1, 1]} : vector<8x96xf32> to vector<8x32xf32>
    %101 = vector.extract_strided_slice %99 {offsets = [0, 32], sizes = [8, 32], strides = [1, 1]} : vector<8x96xf32> to vector<8x32xf32>
    %102 = vector.extract_strided_slice %99 {offsets = [0, 64], sizes = [8, 32], strides = [1, 1]} : vector<8x96xf32> to vector<8x32xf32>
    %103 = vector.extract_strided_slice %92 {offsets = [0, 96], sizes = [8, 32], strides = [1, 1]} : vector<8x128xf32> to vector<8x32xf32>
    %104 = math.tanh %103 : vector<8x32xf32>
    %105 = arith.mulf %101, %64 : vector<8x32xf32>
    %106 = arith.mulf %100, %104 : vector<8x32xf32>
    %107 = arith.addf %105, %106 : vector<8x32xf32>
    %108 = math.tanh %107 : vector<8x32xf32>
    %109 = arith.mulf %102, %108 : vector<8x32xf32>
    %110 = arith.select %93, %109, %63 : vector<8x32xi1>, vector<8x32xf32>
    %111 = arith.select %93, %107, %64 : vector<8x32xi1>, vector<8x32xf32>
    %c16 = arith.constant 16 : index
    %c0_30 = arith.constant 0 : index
    %112 = vector.load %arg9[%c16, %c0_30] : memref<64x128xf32, #tpu.memory_space<vmem>>, vector<8x128xf32>
    %113 = arith.truncf %86 : vector<8x32xf32> to vector<8x32xbf16>
    %cst_31 = arith.constant dense<0.000000e+00> : vector<8x128xf32>
    %114 = tpu.matmul %113, %0, %cst_31 {dimension_numbers = #tpu.dot_dimension_numbers<[1], [0], [0], [1], [0, 0, 1, 1], [], []>} : vector<8x32xbf16>, vector<32x128xbf16>, vector<8x128xf32> -> vector<8x128xf32>
    %115 = arith.addf %112, %114 : vector<8x128xf32>
    %116 = vector.extract_strided_slice %16 {offsets = [16, 0], sizes = [8, 32], strides = [1, 1]} : vector<64x32xi1> to vector<8x32xi1>
    %117 = vector.extract_strided_slice %115 {offsets = [0, 0], sizes = [8, 96], strides = [1, 1]} : vector<8x128xf32> to vector<8x96xf32>
    %118 = arith.negf %117 : vector<8x96xf32>
    %119 = math.exp %118 : vector<8x96xf32>
    %cst_32 = arith.constant 1.000000e+00 : f32
    %120 = vector.broadcast %cst_32 : f32 to vector<8x96xf32>
    %121 = arith.addf %120, %119 : vector<8x96xf32>
    %122 = arith.divf %120, %121 : vector<8x96xf32>
    %123 = vector.extract_strided_slice %122 {offsets = [0, 0], sizes = [8, 32], strides = [1, 1]} : vector<8x96xf32> to vector<8x32xf32>
    %124 = vector.extract_strided_slice %122 {offsets = [0, 32], sizes = [8, 32], strides = [1, 1]} : vector<8x96xf32> to vector<8x32xf32>
    %125 = vector.extract_strided_slice %122 {offsets = [0, 64], sizes = [8, 32], strides = [1, 1]} : vector<8x96xf32> to vector<8x32xf32>
    %126 = vector.extract_strided_slice %115 {offsets = [0, 96], sizes = [8, 32], strides = [1, 1]} : vector<8x128xf32> to vector<8x32xf32>
    %127 = math.tanh %126 : vector<8x32xf32>
    %128 = arith.mulf %124, %87 : vector<8x32xf32>
    %129 = arith.mulf %123, %127 : vector<8x32xf32>
    %130 = arith.addf %128, %129 : vector<8x32xf32>
    %131 = math.tanh %130 : vector<8x32xf32>
    %132 = arith.mulf %125, %131 : vector<8x32xf32>
    %133 = arith.select %116, %132, %86 : vector<8x32xi1>, vector<8x32xf32>
    %134 = arith.select %116, %130, %87 : vector<8x32xi1>, vector<8x32xf32>
    %135 = tpu.concatenate %133, %110 in 1 : vector<8x32xf32>, vector<8x32xf32> -> vector<8x64xf32>
    %136 = arith.truncf %135 : vector<8x64xf32> to vector<8x64xbf16>
    %cst_33 = arith.constant dense<0.000000e+00> : vector<8x128xf32>
    %137 = tpu.matmul %136, %1, %cst_33 {dimension_numbers = #tpu.dot_dimension_numbers<[1], [0], [0], [1], [0, 0, 1, 1], [], []>} : vector<8x64xbf16>, vector<64x128xbf16>, vector<8x128xf32> -> vector<8x128xf32>
    %138 = vector.broadcast %2 : vector<1x128xf32> to vector<8x128xf32>
    %139 = arith.addf %137, %138 : vector<8x128xf32>
    %140 = vector.extract_strided_slice %16 {offsets = [16, 0], sizes = [8, 32], strides = [1, 1]} : vector<64x32xi1> to vector<8x32xi1>
    %141 = vector.extract_strided_slice %139 {offsets = [0, 0], sizes = [8, 96], strides = [1, 1]} : vector<8x128xf32> to vector<8x96xf32>
    %142 = arith.negf %141 : vector<8x96xf32>
    %143 = math.exp %142 : vector<8x96xf32>
    %cst_34 = arith.constant 1.000000e+00 : f32
    %144 = vector.broadcast %cst_34 : f32 to vector<8x96xf32>
    %145 = arith.addf %144, %143 : vector<8x96xf32>
    %146 = arith.divf %144, %145 : vector<8x96xf32>
    %147 = vector.extract_strided_slice %146 {offsets = [0, 0], sizes = [8, 32], strides = [1, 1]} : vector<8x96xf32> to vector<8x32xf32>
    %148 = vector.extract_strided_slice %146 {offsets = [0, 32], sizes = [8, 32], strides = [1, 1]} : vector<8x96xf32> to vector<8x32xf32>
    %149 = vector.extract_strided_slice %146 {offsets = [0, 64], sizes = [8, 32], strides = [1, 1]} : vector<8x96xf32> to vector<8x32xf32>
    %150 = vector.extract_strided_slice %139 {offsets = [0, 96], sizes = [8, 32], strides = [1, 1]} : vector<8x128xf32> to vector<8x32xf32>
    %151 = math.tanh %150 : vector<8x32xf32>
    %152 = arith.mulf %148, %111 : vector<8x32xf32>
    %153 = arith.mulf %147, %151 : vector<8x32xf32>
    %154 = arith.addf %152, %153 : vector<8x32xf32>
    %155 = math.tanh %154 : vector<8x32xf32>
    %156 = arith.mulf %149, %155 : vector<8x32xf32>
    %157 = arith.select %140, %156, %110 : vector<8x32xi1>, vector<8x32xf32>
    %158 = arith.select %140, %154, %111 : vector<8x32xi1>, vector<8x32xf32>
    %c24 = arith.constant 24 : index
    %c0_35 = arith.constant 0 : index
    %159 = vector.load %arg9[%c24, %c0_35] : memref<64x128xf32, #tpu.memory_space<vmem>>, vector<8x128xf32>
    %160 = arith.truncf %133 : vector<8x32xf32> to vector<8x32xbf16>
    %cst_36 = arith.constant dense<0.000000e+00> : vector<8x128xf32>
    %161 = tpu.matmul %160, %0, %cst_36 {dimension_numbers = #tpu.dot_dimension_numbers<[1], [0], [0], [1], [0, 0, 1, 1], [], []>} : vector<8x32xbf16>, vector<32x128xbf16>, vector<8x128xf32> -> vector<8x128xf32>
    %162 = arith.addf %159, %161 : vector<8x128xf32>
    %163 = vector.extract_strided_slice %16 {offsets = [24, 0], sizes = [8, 32], strides = [1, 1]} : vector<64x32xi1> to vector<8x32xi1>
    %164 = vector.extract_strided_slice %162 {offsets = [0, 0], sizes = [8, 96], strides = [1, 1]} : vector<8x128xf32> to vector<8x96xf32>
    %165 = arith.negf %164 : vector<8x96xf32>
    %166 = math.exp %165 : vector<8x96xf32>
    %cst_37 = arith.constant 1.000000e+00 : f32
    %167 = vector.broadcast %cst_37 : f32 to vector<8x96xf32>
    %168 = arith.addf %167, %166 : vector<8x96xf32>
    %169 = arith.divf %167, %168 : vector<8x96xf32>
    %170 = vector.extract_strided_slice %169 {offsets = [0, 0], sizes = [8, 32], strides = [1, 1]} : vector<8x96xf32> to vector<8x32xf32>
    %171 = vector.extract_strided_slice %169 {offsets = [0, 32], sizes = [8, 32], strides = [1, 1]} : vector<8x96xf32> to vector<8x32xf32>
    %172 = vector.extract_strided_slice %169 {offsets = [0, 64], sizes = [8, 32], strides = [1, 1]} : vector<8x96xf32> to vector<8x32xf32>
    %173 = vector.extract_strided_slice %162 {offsets = [0, 96], sizes = [8, 32], strides = [1, 1]} : vector<8x128xf32> to vector<8x32xf32>
    %174 = math.tanh %173 : vector<8x32xf32>
    %175 = arith.mulf %171, %134 : vector<8x32xf32>
    %176 = arith.mulf %170, %174 : vector<8x32xf32>
    %177 = arith.addf %175, %176 : vector<8x32xf32>
    %178 = math.tanh %177 : vector<8x32xf32>
    %179 = arith.mulf %172, %178 : vector<8x32xf32>
    %180 = arith.select %163, %179, %133 : vector<8x32xi1>, vector<8x32xf32>
    %181 = arith.select %163, %177, %134 : vector<8x32xi1>, vector<8x32xf32>
    %182 = tpu.concatenate %180, %157 in 1 : vector<8x32xf32>, vector<8x32xf32> -> vector<8x64xf32>
    %183 = arith.truncf %182 : vector<8x64xf32> to vector<8x64xbf16>
    %cst_38 = arith.constant dense<0.000000e+00> : vector<8x128xf32>
    %184 = tpu.matmul %183, %1, %cst_38 {dimension_numbers = #tpu.dot_dimension_numbers<[1], [0], [0], [1], [0, 0, 1, 1], [], []>} : vector<8x64xbf16>, vector<64x128xbf16>, vector<8x128xf32> -> vector<8x128xf32>
    %185 = vector.broadcast %2 : vector<1x128xf32> to vector<8x128xf32>
    %186 = arith.addf %184, %185 : vector<8x128xf32>
    %187 = vector.extract_strided_slice %16 {offsets = [24, 0], sizes = [8, 32], strides = [1, 1]} : vector<64x32xi1> to vector<8x32xi1>
    %188 = vector.extract_strided_slice %186 {offsets = [0, 0], sizes = [8, 96], strides = [1, 1]} : vector<8x128xf32> to vector<8x96xf32>
    %189 = arith.negf %188 : vector<8x96xf32>
    %190 = math.exp %189 : vector<8x96xf32>
    %cst_39 = arith.constant 1.000000e+00 : f32
    %191 = vector.broadcast %cst_39 : f32 to vector<8x96xf32>
    %192 = arith.addf %191, %190 : vector<8x96xf32>
    %193 = arith.divf %191, %192 : vector<8x96xf32>
    %194 = vector.extract_strided_slice %193 {offsets = [0, 0], sizes = [8, 32], strides = [1, 1]} : vector<8x96xf32> to vector<8x32xf32>
    %195 = vector.extract_strided_slice %193 {offsets = [0, 32], sizes = [8, 32], strides = [1, 1]} : vector<8x96xf32> to vector<8x32xf32>
    %196 = vector.extract_strided_slice %193 {offsets = [0, 64], sizes = [8, 32], strides = [1, 1]} : vector<8x96xf32> to vector<8x32xf32>
    %197 = vector.extract_strided_slice %186 {offsets = [0, 96], sizes = [8, 32], strides = [1, 1]} : vector<8x128xf32> to vector<8x32xf32>
    %198 = math.tanh %197 : vector<8x32xf32>
    %199 = arith.mulf %195, %158 : vector<8x32xf32>
    %200 = arith.mulf %194, %198 : vector<8x32xf32>
    %201 = arith.addf %199, %200 : vector<8x32xf32>
    %202 = math.tanh %201 : vector<8x32xf32>
    %203 = arith.mulf %196, %202 : vector<8x32xf32>
    %204 = arith.select %187, %203, %157 : vector<8x32xi1>, vector<8x32xf32>
    %205 = arith.select %187, %201, %158 : vector<8x32xi1>, vector<8x32xf32>
    %c32 = arith.constant 32 : index
    %c0_40 = arith.constant 0 : index
    %206 = vector.load %arg9[%c32, %c0_40] : memref<64x128xf32, #tpu.memory_space<vmem>>, vector<8x128xf32>
    %207 = arith.truncf %180 : vector<8x32xf32> to vector<8x32xbf16>
    %cst_41 = arith.constant dense<0.000000e+00> : vector<8x128xf32>
    %208 = tpu.matmul %207, %0, %cst_41 {dimension_numbers = #tpu.dot_dimension_numbers<[1], [0], [0], [1], [0, 0, 1, 1], [], []>} : vector<8x32xbf16>, vector<32x128xbf16>, vector<8x128xf32> -> vector<8x128xf32>
    %209 = arith.addf %206, %208 : vector<8x128xf32>
    %210 = vector.extract_strided_slice %16 {offsets = [32, 0], sizes = [8, 32], strides = [1, 1]} : vector<64x32xi1> to vector<8x32xi1>
    %211 = vector.extract_strided_slice %209 {offsets = [0, 0], sizes = [8, 96], strides = [1, 1]} : vector<8x128xf32> to vector<8x96xf32>
    %212 = arith.negf %211 : vector<8x96xf32>
    %213 = math.exp %212 : vector<8x96xf32>
    %cst_42 = arith.constant 1.000000e+00 : f32
    %214 = vector.broadcast %cst_42 : f32 to vector<8x96xf32>
    %215 = arith.addf %214, %213 : vector<8x96xf32>
    %216 = arith.divf %214, %215 : vector<8x96xf32>
    %217 = vector.extract_strided_slice %216 {offsets = [0, 0], sizes = [8, 32], strides = [1, 1]} : vector<8x96xf32> to vector<8x32xf32>
    %218 = vector.extract_strided_slice %216 {offsets = [0, 32], sizes = [8, 32], strides = [1, 1]} : vector<8x96xf32> to vector<8x32xf32>
    %219 = vector.extract_strided_slice %216 {offsets = [0, 64], sizes = [8, 32], strides = [1, 1]} : vector<8x96xf32> to vector<8x32xf32>
    %220 = vector.extract_strided_slice %209 {offsets = [0, 96], sizes = [8, 32], strides = [1, 1]} : vector<8x128xf32> to vector<8x32xf32>
    %221 = math.tanh %220 : vector<8x32xf32>
    %222 = arith.mulf %218, %181 : vector<8x32xf32>
    %223 = arith.mulf %217, %221 : vector<8x32xf32>
    %224 = arith.addf %222, %223 : vector<8x32xf32>
    %225 = math.tanh %224 : vector<8x32xf32>
    %226 = arith.mulf %219, %225 : vector<8x32xf32>
    %227 = arith.select %210, %226, %180 : vector<8x32xi1>, vector<8x32xf32>
    %228 = arith.select %210, %224, %181 : vector<8x32xi1>, vector<8x32xf32>
    %229 = tpu.concatenate %227, %204 in 1 : vector<8x32xf32>, vector<8x32xf32> -> vector<8x64xf32>
    %230 = arith.truncf %229 : vector<8x64xf32> to vector<8x64xbf16>
    %cst_43 = arith.constant dense<0.000000e+00> : vector<8x128xf32>
    %231 = tpu.matmul %230, %1, %cst_43 {dimension_numbers = #tpu.dot_dimension_numbers<[1], [0], [0], [1], [0, 0, 1, 1], [], []>} : vector<8x64xbf16>, vector<64x128xbf16>, vector<8x128xf32> -> vector<8x128xf32>
    %232 = vector.broadcast %2 : vector<1x128xf32> to vector<8x128xf32>
    %233 = arith.addf %231, %232 : vector<8x128xf32>
    %234 = vector.extract_strided_slice %16 {offsets = [32, 0], sizes = [8, 32], strides = [1, 1]} : vector<64x32xi1> to vector<8x32xi1>
    %235 = vector.extract_strided_slice %233 {offsets = [0, 0], sizes = [8, 96], strides = [1, 1]} : vector<8x128xf32> to vector<8x96xf32>
    %236 = arith.negf %235 : vector<8x96xf32>
    %237 = math.exp %236 : vector<8x96xf32>
    %cst_44 = arith.constant 1.000000e+00 : f32
    %238 = vector.broadcast %cst_44 : f32 to vector<8x96xf32>
    %239 = arith.addf %238, %237 : vector<8x96xf32>
    %240 = arith.divf %238, %239 : vector<8x96xf32>
    %241 = vector.extract_strided_slice %240 {offsets = [0, 0], sizes = [8, 32], strides = [1, 1]} : vector<8x96xf32> to vector<8x32xf32>
    %242 = vector.extract_strided_slice %240 {offsets = [0, 32], sizes = [8, 32], strides = [1, 1]} : vector<8x96xf32> to vector<8x32xf32>
    %243 = vector.extract_strided_slice %240 {offsets = [0, 64], sizes = [8, 32], strides = [1, 1]} : vector<8x96xf32> to vector<8x32xf32>
    %244 = vector.extract_strided_slice %233 {offsets = [0, 96], sizes = [8, 32], strides = [1, 1]} : vector<8x128xf32> to vector<8x32xf32>
    %245 = math.tanh %244 : vector<8x32xf32>
    %246 = arith.mulf %242, %205 : vector<8x32xf32>
    %247 = arith.mulf %241, %245 : vector<8x32xf32>
    %248 = arith.addf %246, %247 : vector<8x32xf32>
    %249 = math.tanh %248 : vector<8x32xf32>
    %250 = arith.mulf %243, %249 : vector<8x32xf32>
    %251 = arith.select %234, %250, %204 : vector<8x32xi1>, vector<8x32xf32>
    %252 = arith.select %234, %248, %205 : vector<8x32xi1>, vector<8x32xf32>
    %c40 = arith.constant 40 : index
    %c0_45 = arith.constant 0 : index
    %253 = vector.load %arg9[%c40, %c0_45] : memref<64x128xf32, #tpu.memory_space<vmem>>, vector<8x128xf32>
    %254 = arith.truncf %227 : vector<8x32xf32> to vector<8x32xbf16>
    %cst_46 = arith.constant dense<0.000000e+00> : vector<8x128xf32>
    %255 = tpu.matmul %254, %0, %cst_46 {dimension_numbers = #tpu.dot_dimension_numbers<[1], [0], [0], [1], [0, 0, 1, 1], [], []>} : vector<8x32xbf16>, vector<32x128xbf16>, vector<8x128xf32> -> vector<8x128xf32>
    %256 = arith.addf %253, %255 : vector<8x128xf32>
    %257 = vector.extract_strided_slice %16 {offsets = [40, 0], sizes = [8, 32], strides = [1, 1]} : vector<64x32xi1> to vector<8x32xi1>
    %258 = vector.extract_strided_slice %256 {offsets = [0, 0], sizes = [8, 96], strides = [1, 1]} : vector<8x128xf32> to vector<8x96xf32>
    %259 = arith.negf %258 : vector<8x96xf32>
    %260 = math.exp %259 : vector<8x96xf32>
    %cst_47 = arith.constant 1.000000e+00 : f32
    %261 = vector.broadcast %cst_47 : f32 to vector<8x96xf32>
    %262 = arith.addf %261, %260 : vector<8x96xf32>
    %263 = arith.divf %261, %262 : vector<8x96xf32>
    %264 = vector.extract_strided_slice %263 {offsets = [0, 0], sizes = [8, 32], strides = [1, 1]} : vector<8x96xf32> to vector<8x32xf32>
    %265 = vector.extract_strided_slice %263 {offsets = [0, 32], sizes = [8, 32], strides = [1, 1]} : vector<8x96xf32> to vector<8x32xf32>
    %266 = vector.extract_strided_slice %263 {offsets = [0, 64], sizes = [8, 32], strides = [1, 1]} : vector<8x96xf32> to vector<8x32xf32>
    %267 = vector.extract_strided_slice %256 {offsets = [0, 96], sizes = [8, 32], strides = [1, 1]} : vector<8x128xf32> to vector<8x32xf32>
    %268 = math.tanh %267 : vector<8x32xf32>
    %269 = arith.mulf %265, %228 : vector<8x32xf32>
    %270 = arith.mulf %264, %268 : vector<8x32xf32>
    %271 = arith.addf %269, %270 : vector<8x32xf32>
    %272 = math.tanh %271 : vector<8x32xf32>
    %273 = arith.mulf %266, %272 : vector<8x32xf32>
    %274 = arith.select %257, %273, %227 : vector<8x32xi1>, vector<8x32xf32>
    %275 = arith.select %257, %271, %228 : vector<8x32xi1>, vector<8x32xf32>
    %276 = tpu.concatenate %274, %251 in 1 : vector<8x32xf32>, vector<8x32xf32> -> vector<8x64xf32>
    %277 = arith.truncf %276 : vector<8x64xf32> to vector<8x64xbf16>
    %cst_48 = arith.constant dense<0.000000e+00> : vector<8x128xf32>
    %278 = tpu.matmul %277, %1, %cst_48 {dimension_numbers = #tpu.dot_dimension_numbers<[1], [0], [0], [1], [0, 0, 1, 1], [], []>} : vector<8x64xbf16>, vector<64x128xbf16>, vector<8x128xf32> -> vector<8x128xf32>
    %279 = vector.broadcast %2 : vector<1x128xf32> to vector<8x128xf32>
    %280 = arith.addf %278, %279 : vector<8x128xf32>
    %281 = vector.extract_strided_slice %16 {offsets = [40, 0], sizes = [8, 32], strides = [1, 1]} : vector<64x32xi1> to vector<8x32xi1>
    %282 = vector.extract_strided_slice %280 {offsets = [0, 0], sizes = [8, 96], strides = [1, 1]} : vector<8x128xf32> to vector<8x96xf32>
    %283 = arith.negf %282 : vector<8x96xf32>
    %284 = math.exp %283 : vector<8x96xf32>
    %cst_49 = arith.constant 1.000000e+00 : f32
    %285 = vector.broadcast %cst_49 : f32 to vector<8x96xf32>
    %286 = arith.addf %285, %284 : vector<8x96xf32>
    %287 = arith.divf %285, %286 : vector<8x96xf32>
    %288 = vector.extract_strided_slice %287 {offsets = [0, 0], sizes = [8, 32], strides = [1, 1]} : vector<8x96xf32> to vector<8x32xf32>
    %289 = vector.extract_strided_slice %287 {offsets = [0, 32], sizes = [8, 32], strides = [1, 1]} : vector<8x96xf32> to vector<8x32xf32>
    %290 = vector.extract_strided_slice %287 {offsets = [0, 64], sizes = [8, 32], strides = [1, 1]} : vector<8x96xf32> to vector<8x32xf32>
    %291 = vector.extract_strided_slice %280 {offsets = [0, 96], sizes = [8, 32], strides = [1, 1]} : vector<8x128xf32> to vector<8x32xf32>
    %292 = math.tanh %291 : vector<8x32xf32>
    %293 = arith.mulf %289, %252 : vector<8x32xf32>
    %294 = arith.mulf %288, %292 : vector<8x32xf32>
    %295 = arith.addf %293, %294 : vector<8x32xf32>
    %296 = math.tanh %295 : vector<8x32xf32>
    %297 = arith.mulf %290, %296 : vector<8x32xf32>
    %298 = arith.select %281, %297, %251 : vector<8x32xi1>, vector<8x32xf32>
    %299 = arith.select %281, %295, %252 : vector<8x32xi1>, vector<8x32xf32>
    %c48 = arith.constant 48 : index
    %c0_50 = arith.constant 0 : index
    %300 = vector.load %arg9[%c48, %c0_50] : memref<64x128xf32, #tpu.memory_space<vmem>>, vector<8x128xf32>
    %301 = arith.truncf %274 : vector<8x32xf32> to vector<8x32xbf16>
    %cst_51 = arith.constant dense<0.000000e+00> : vector<8x128xf32>
    %302 = tpu.matmul %301, %0, %cst_51 {dimension_numbers = #tpu.dot_dimension_numbers<[1], [0], [0], [1], [0, 0, 1, 1], [], []>} : vector<8x32xbf16>, vector<32x128xbf16>, vector<8x128xf32> -> vector<8x128xf32>
    %303 = arith.addf %300, %302 : vector<8x128xf32>
    %304 = vector.extract_strided_slice %16 {offsets = [48, 0], sizes = [8, 32], strides = [1, 1]} : vector<64x32xi1> to vector<8x32xi1>
    %305 = vector.extract_strided_slice %303 {offsets = [0, 0], sizes = [8, 96], strides = [1, 1]} : vector<8x128xf32> to vector<8x96xf32>
    %306 = arith.negf %305 : vector<8x96xf32>
    %307 = math.exp %306 : vector<8x96xf32>
    %cst_52 = arith.constant 1.000000e+00 : f32
    %308 = vector.broadcast %cst_52 : f32 to vector<8x96xf32>
    %309 = arith.addf %308, %307 : vector<8x96xf32>
    %310 = arith.divf %308, %309 : vector<8x96xf32>
    %311 = vector.extract_strided_slice %310 {offsets = [0, 0], sizes = [8, 32], strides = [1, 1]} : vector<8x96xf32> to vector<8x32xf32>
    %312 = vector.extract_strided_slice %310 {offsets = [0, 32], sizes = [8, 32], strides = [1, 1]} : vector<8x96xf32> to vector<8x32xf32>
    %313 = vector.extract_strided_slice %310 {offsets = [0, 64], sizes = [8, 32], strides = [1, 1]} : vector<8x96xf32> to vector<8x32xf32>
    %314 = vector.extract_strided_slice %303 {offsets = [0, 96], sizes = [8, 32], strides = [1, 1]} : vector<8x128xf32> to vector<8x32xf32>
    %315 = math.tanh %314 : vector<8x32xf32>
    %316 = arith.mulf %312, %275 : vector<8x32xf32>
    %317 = arith.mulf %311, %315 : vector<8x32xf32>
    %318 = arith.addf %316, %317 : vector<8x32xf32>
    %319 = math.tanh %318 : vector<8x32xf32>
    %320 = arith.mulf %313, %319 : vector<8x32xf32>
    %321 = arith.select %304, %320, %274 : vector<8x32xi1>, vector<8x32xf32>
    %322 = arith.select %304, %318, %275 : vector<8x32xi1>, vector<8x32xf32>
    %323 = tpu.concatenate %321, %298 in 1 : vector<8x32xf32>, vector<8x32xf32> -> vector<8x64xf32>
    %324 = arith.truncf %323 : vector<8x64xf32> to vector<8x64xbf16>
    %cst_53 = arith.constant dense<0.000000e+00> : vector<8x128xf32>
    %325 = tpu.matmul %324, %1, %cst_53 {dimension_numbers = #tpu.dot_dimension_numbers<[1], [0], [0], [1], [0, 0, 1, 1], [], []>} : vector<8x64xbf16>, vector<64x128xbf16>, vector<8x128xf32> -> vector<8x128xf32>
    %326 = vector.broadcast %2 : vector<1x128xf32> to vector<8x128xf32>
    %327 = arith.addf %325, %326 : vector<8x128xf32>
    %328 = vector.extract_strided_slice %16 {offsets = [48, 0], sizes = [8, 32], strides = [1, 1]} : vector<64x32xi1> to vector<8x32xi1>
    %329 = vector.extract_strided_slice %327 {offsets = [0, 0], sizes = [8, 96], strides = [1, 1]} : vector<8x128xf32> to vector<8x96xf32>
    %330 = arith.negf %329 : vector<8x96xf32>
    %331 = math.exp %330 : vector<8x96xf32>
    %cst_54 = arith.constant 1.000000e+00 : f32
    %332 = vector.broadcast %cst_54 : f32 to vector<8x96xf32>
    %333 = arith.addf %332, %331 : vector<8x96xf32>
    %334 = arith.divf %332, %333 : vector<8x96xf32>
    %335 = vector.extract_strided_slice %334 {offsets = [0, 0], sizes = [8, 32], strides = [1, 1]} : vector<8x96xf32> to vector<8x32xf32>
    %336 = vector.extract_strided_slice %334 {offsets = [0, 32], sizes = [8, 32], strides = [1, 1]} : vector<8x96xf32> to vector<8x32xf32>
    %337 = vector.extract_strided_slice %334 {offsets = [0, 64], sizes = [8, 32], strides = [1, 1]} : vector<8x96xf32> to vector<8x32xf32>
    %338 = vector.extract_strided_slice %327 {offsets = [0, 96], sizes = [8, 32], strides = [1, 1]} : vector<8x128xf32> to vector<8x32xf32>
    %339 = math.tanh %338 : vector<8x32xf32>
    %340 = arith.mulf %336, %299 : vector<8x32xf32>
    %341 = arith.mulf %335, %339 : vector<8x32xf32>
    %342 = arith.addf %340, %341 : vector<8x32xf32>
    %343 = math.tanh %342 : vector<8x32xf32>
    %344 = arith.mulf %337, %343 : vector<8x32xf32>
    %345 = arith.select %328, %344, %298 : vector<8x32xi1>, vector<8x32xf32>
    %346 = arith.select %328, %342, %299 : vector<8x32xi1>, vector<8x32xf32>
    %c56 = arith.constant 56 : index
    %c0_55 = arith.constant 0 : index
    %347 = vector.load %arg9[%c56, %c0_55] : memref<64x128xf32, #tpu.memory_space<vmem>>, vector<8x128xf32>
    %348 = arith.truncf %321 : vector<8x32xf32> to vector<8x32xbf16>
    %cst_56 = arith.constant dense<0.000000e+00> : vector<8x128xf32>
    %349 = tpu.matmul %348, %0, %cst_56 {dimension_numbers = #tpu.dot_dimension_numbers<[1], [0], [0], [1], [0, 0, 1, 1], [], []>} : vector<8x32xbf16>, vector<32x128xbf16>, vector<8x128xf32> -> vector<8x128xf32>
    %350 = arith.addf %347, %349 : vector<8x128xf32>
    %351 = vector.extract_strided_slice %16 {offsets = [56, 0], sizes = [8, 32], strides = [1, 1]} : vector<64x32xi1> to vector<8x32xi1>
    %352 = vector.extract_strided_slice %350 {offsets = [0, 0], sizes = [8, 96], strides = [1, 1]} : vector<8x128xf32> to vector<8x96xf32>
    %353 = arith.negf %352 : vector<8x96xf32>
    %354 = math.exp %353 : vector<8x96xf32>
    %cst_57 = arith.constant 1.000000e+00 : f32
    %355 = vector.broadcast %cst_57 : f32 to vector<8x96xf32>
    %356 = arith.addf %355, %354 : vector<8x96xf32>
    %357 = arith.divf %355, %356 : vector<8x96xf32>
    %358 = vector.extract_strided_slice %357 {offsets = [0, 0], sizes = [8, 32], strides = [1, 1]} : vector<8x96xf32> to vector<8x32xf32>
    %359 = vector.extract_strided_slice %357 {offsets = [0, 32], sizes = [8, 32], strides = [1, 1]} : vector<8x96xf32> to vector<8x32xf32>
    %360 = vector.extract_strided_slice %357 {offsets = [0, 64], sizes = [8, 32], strides = [1, 1]} : vector<8x96xf32> to vector<8x32xf32>
    %361 = vector.extract_strided_slice %350 {offsets = [0, 96], sizes = [8, 32], strides = [1, 1]} : vector<8x128xf32> to vector<8x32xf32>
    %362 = math.tanh %361 : vector<8x32xf32>
    %363 = arith.mulf %359, %322 : vector<8x32xf32>
    %364 = arith.mulf %358, %362 : vector<8x32xf32>
    %365 = arith.addf %363, %364 : vector<8x32xf32>
    %366 = math.tanh %365 : vector<8x32xf32>
    %367 = arith.mulf %360, %366 : vector<8x32xf32>
    %368 = arith.select %351, %367, %321 : vector<8x32xi1>, vector<8x32xf32>
    %369 = tpu.concatenate %368, %345 in 1 : vector<8x32xf32>, vector<8x32xf32> -> vector<8x64xf32>
    %370 = arith.truncf %369 : vector<8x64xf32> to vector<8x64xbf16>
    %cst_58 = arith.constant dense<0.000000e+00> : vector<8x128xf32>
    %371 = tpu.matmul %370, %1, %cst_58 {dimension_numbers = #tpu.dot_dimension_numbers<[1], [0], [0], [1], [0, 0, 1, 1], [], []>} : vector<8x64xbf16>, vector<64x128xbf16>, vector<8x128xf32> -> vector<8x128xf32>
    %372 = vector.broadcast %2 : vector<1x128xf32> to vector<8x128xf32>
    %373 = arith.addf %371, %372 : vector<8x128xf32>
    %374 = vector.extract_strided_slice %16 {offsets = [56, 0], sizes = [8, 32], strides = [1, 1]} : vector<64x32xi1> to vector<8x32xi1>
    %375 = vector.extract_strided_slice %373 {offsets = [0, 0], sizes = [8, 96], strides = [1, 1]} : vector<8x128xf32> to vector<8x96xf32>
    %376 = arith.negf %375 : vector<8x96xf32>
    %377 = math.exp %376 : vector<8x96xf32>
    %cst_59 = arith.constant 1.000000e+00 : f32
    %378 = vector.broadcast %cst_59 : f32 to vector<8x96xf32>
    %379 = arith.addf %378, %377 : vector<8x96xf32>
    %380 = arith.divf %378, %379 : vector<8x96xf32>
    %381 = vector.extract_strided_slice %380 {offsets = [0, 0], sizes = [8, 32], strides = [1, 1]} : vector<8x96xf32> to vector<8x32xf32>
    %382 = vector.extract_strided_slice %380 {offsets = [0, 32], sizes = [8, 32], strides = [1, 1]} : vector<8x96xf32> to vector<8x32xf32>
    %383 = vector.extract_strided_slice %380 {offsets = [0, 64], sizes = [8, 32], strides = [1, 1]} : vector<8x96xf32> to vector<8x32xf32>
    %384 = vector.extract_strided_slice %373 {offsets = [0, 96], sizes = [8, 32], strides = [1, 1]} : vector<8x128xf32> to vector<8x32xf32>
    %385 = math.tanh %384 : vector<8x32xf32>
    %386 = arith.mulf %382, %346 : vector<8x32xf32>
    %387 = arith.mulf %381, %385 : vector<8x32xf32>
    %388 = arith.addf %386, %387 : vector<8x32xf32>
    %389 = math.tanh %388 : vector<8x32xf32>
    %390 = arith.mulf %383, %389 : vector<8x32xf32>
    %391 = arith.select %374, %390, %345 : vector<8x32xi1>, vector<8x32xf32>
    %c0_60 = arith.constant 0 : index
    %c0_61 = arith.constant 0 : index
    %392 = vector.load %arg8[%c0_60, %c0_61] : memref<8x32xf32, #tpu.memory_space<vmem>>, vector<8x32xf32>
    tpu.vector_store %arg8[%c0_60, %c0_61], %391 {strides = array<i32>} : memref<8x32xf32, #tpu.memory_space<vmem>>, vector<8x32xf32>,
    return
  }
  func.func @transform_0(%arg0: i32) -> (i32, i32, i32) {
    %c0_i32 = arith.constant 0 : i32
    %c0_i32_0 = arith.constant 0 : i32
    %c0_i32_1 = arith.constant 0 : i32
    return %arg0, %c0_i32, %c0_i32_0 : i32, i32, i32
  }
  func.func @transform_1(%arg0: i32) -> (i32, i32, i32) {
    %c0_i32 = arith.constant 0 : i32
    %c0_i32_0 = arith.constant 0 : i32
    %c0_i32_1 = arith.constant 0 : i32
    return %arg0, %c0_i32, %c0_i32_0 : i32, i32, i32
  }
  func.func @transform_2(%arg0: i32) -> (i32, i32) {
    %c0_i32 = arith.constant 0 : i32
    %c0_i32_0 = arith.constant 0 : i32
    %c0_i32_1 = arith.constant 0 : i32
    return %c0_i32, %c0_i32_0 : i32, i32
  }
  func.func @transform_3(%arg0: i32) -> (i32, i32) {
    %c0_i32 = arith.constant 0 : i32
    %c0_i32_0 = arith.constant 0 : i32
    %c0_i32_1 = arith.constant 0 : i32
    return %c0_i32, %c0_i32_0 : i32, i32
  }
  func.func @transform_4(%arg0: i32) -> (i32, i32) {
    %c0_i32 = arith.constant 0 : i32
    %c0_i32_0 = arith.constant 0 : i32
    %c0_i32_1 = arith.constant 0 : i32
    return %c0_i32, %c0_i32_0 : i32, i32
  }
  func.func @transform_5(%arg0: i32) -> (i32, i32) {
    %c0_i32 = arith.constant 0 : i32
    %c0_i32_0 = arith.constant 0 : i32
    %c0_i32_1 = arith.constant 0 : i32
    return %c0_i32, %c0_i32_0 : i32, i32
  }
  func.func @transform_6(%arg0: i32) -> (i32, i32) {
    %c0_i32 = arith.constant 0 : i32
    %c0_i32_0 = arith.constant 0 : i32
    %c0_i32_1 = arith.constant 0 : i32
    return %c0_i32, %c0_i32_0 : i32, i32
  }
  func.func @transform_7(%arg0: i32) -> (i32, i32) {
    %c0_i32 = arith.constant 0 : i32
    %c0_i32_0 = arith.constant 0 : i32
    return %arg0, %c0_i32 : i32, i32
  }
}

</mosaic_0001>

<llo_original>
// kernel: tpu_custom_call.1
$region0: #{tpu_custom_call.1}
  #allocation0 [shape = 'u32[]', space=smem, size = 0x4, offset = 0x4, fixed_abs, tag = 'smem constant byte address 0x4 - core index']
  #allocation1 [shape = 'u32[144,128]{1,0:T(1,128)}', space=vmem, size = 0x12000, scoped, tag = 'internal scratch']
  #allocation2 [shape = 'f32[64,128]{1,0:T(8,128)}', space=vmem, size = 0x8000, scoped, tag = 'scratch operand']
  %s0 = inlined_call_operand.vmem [shape: f32[1,64,1], index: 0, kind: input, shape index: {}]
  %s1 = inlined_call_operand.vmem [shape: bf16[1,64,32], index: 1, kind: input, shape index: {}]
  %s2 = inlined_call_operand.vmem [shape: bf16[32,128], index: 2, kind: input, shape index: {}]
  %s3 = inlined_call_operand.vmem [shape: bf16[32,128], index: 3, kind: input, shape index: {}]
  %s4 = inlined_call_operand.vmem [shape: f32[1,128], index: 4, kind: input, shape index: {}]
  %s5 = inlined_call_operand.vmem [shape: bf16[64,128], index: 5, kind: input, shape index: {}]
  %s6 = inlined_call_operand.vmem [shape: f32[1,128], index: 6, kind: input, shape index: {}]
  %s7 = inlined_call_operand.hbm [shape: f32[8,32], index: 7, kind: output, shape index: {}]
  %s8 = sld [smem:[#allocation0]]
  $region38: #{tpu_custom_call.1} parent=0
    _
  %s10 = ssub.s32 1, %s8
  %s11 = scalar_select 0, %s10, %s8
  $region1: #{tpu_custom_call.1} parent=0
    #allocation3 [shape = 'u8[4096]{0}', space=vmem, size = 0x1000, scoped, tag = 'output window, operand 0, single buffered']
    #allocation4 [shape = 's32[1]{0}', space=sflag, size = 0x4, scoped, tag = 'scoped memory for tpu_custom_call.1']
    %12 = vsyncpa [#allocation4], 0
    // Predicated region
    $region2: #{tpu_custom_call.1} parent=1 // pred_check
      _
    $region3: #{tpu_custom_call.1} parent=1 // pred_check_branch
      %14 = sbr.rel (0) target = $region5
    $region4: #{tpu_custom_call.1} parent=1 // pred_region
      _
    $region5: #{tpu_custom_call.1} parent=1 // pred_fallthru
      _
    // Predicated region
    $region6: #{tpu_custom_call.1} parent=1 // pred_check
      _
    $region7: #{tpu_custom_call.1} parent=1 // pred_check_branch
      %16 = sbr.rel (0) target = $region9
    $region8: #{tpu_custom_call.1} parent=1 // pred_region
      _
    $region9: #{tpu_custom_call.1} parent=1 // pred_fallthru
      _
    // Predicated region
    $region10: #{tpu_custom_call.1} parent=1 // pred_check
      _
    $region11: #{tpu_custom_call.1} parent=1 // pred_check_branch
      %18 = sbr.rel (0) target = $region13
    $region12: #{tpu_custom_call.1} parent=1 // pred_region
      _
    $region13: #{tpu_custom_call.1} parent=1 // pred_fallthru
      _
    // Predicated region
    $region14: #{tpu_custom_call.1} parent=1 // pred_check
      _
    $region15: #{tpu_custom_call.1} parent=1 // pred_check_branch
      %20 = sbr.rel (0) target = $region17
    $region16: #{tpu_custom_call.1} parent=1 // pred_region
      _
    $region17: #{tpu_custom_call.1} parent=1 // pred_fallthru
      _
    // Predicated region
    $region18: #{tpu_custom_call.1} parent=1 // pred_check
      _
    $region19: #{tpu_custom_call.1} parent=1 // pred_check_branch
      %22 = sbr.rel (0) target = $region21
    $region20: #{tpu_custom_call.1} parent=1 // pred_region
      _
    $region21: #{tpu_custom_call.1} parent=1 // pred_fallthru
      _
    // Predicated region
    $region22: #{tpu_custom_call.1} parent=1 // pred_check
      _
    $region23: #{tpu_custom_call.1} parent=1 // pred_check_branch
      %24 = sbr.rel (0) target = $region25
    $region24: #{tpu_custom_call.1} parent=1 // pred_region
      _
    $region25: #{tpu_custom_call.1} parent=1 // pred_fallthru
      _
    // Predicated region
    $region26: #{tpu_custom_call.1} parent=1 // pred_check
      _
    $region27: #{tpu_custom_call.1} parent=1 // pred_check_branch
      %26 = sbr.rel (0) target = $region29
    $region28: #{tpu_custom_call.1} parent=1 // pred_region
      _
    $region29: #{tpu_custom_call.1} parent=1 // pred_fallthru
      _
    %v28 = vld [vmem:[%s3] sm:$0xf]
    %v29 = vld [vmem:[%s3 + $0x4] sm:$0xf]
    %v30 = vld [vmem:[%s3 + $0x8] sm:$0xf]
    %v31 = vld [vmem:[%s3 + $0xc] sm:$0xf]
    %v32 = vld [vmem:[%s5] sm:$0xf]
    %v33 = vld [vmem:[%s5 + $0x4] sm:$0xf]
    %v34 = vld [vmem:[%s5 + $0x8] sm:$0xf]
    %v35 = vld [vmem:[%s5 + $0xc] sm:$0xf]
    %v36 = vld [vmem:[%s5 + $0x10] sm:$0xf]
    %v37 = vld [vmem:[%s5 + $0x14] sm:$0xf]
    %v38 = vld [vmem:[%s5 + $0x18] sm:$0xf]
    %v39 = vld [vmem:[%s5 + $0x1c] sm:$0xf]
    %v40 = vld [vmem:[%s6] sm:$0x1]
    %v41 = vld [vmem:[%s1] sm:$0xf]
    %v42 = vld [vmem:[%s1 + $0x4] sm:$0xf]
    %v43 = vld [vmem:[%s1 + $0x8] sm:$0xf]
    %v44 = vld [vmem:[%s1 + $0xc] sm:$0xf]
    %v45 = vld [vmem:[%s1 + $0x10] sm:$0xf]
    %v46 = vld [vmem:[%s1 + $0x14] sm:$0xf]
    %v47 = vld [vmem:[%s1 + $0x18] sm:$0xf]
    %v48 = vld [vmem:[%s1 + $0x1c] sm:$0xf]
    %v49 = vld [vmem:[%s2] sm:$0xf]
    %v50 = vld [vmem:[%s2 + $0x4] sm:$0xf]
    %v51 = vld [vmem:[%s2 + $0x8] sm:$0xf]
    %v52 = vld [vmem:[%s2 + $0xc] sm:$0xf]
    %v53 = vld [vmem:[%s4] sm:$0x1]
    %v55 = vlaneseq
    %v56 = vshrl.u32 %v55, 7
    %v57 = vsub.s32 0, %v56
    %v58 = vrot.slane %v53, %v57
    %v68 = vunpack.c.l.b16 %v41
    %v69 = vunpack.c.l.b16 %v42
    %v70 = vunpack.c.l.b16 %v43
    %v71 = vunpack.c.l.b16 %v44
    %v72 = vunpack.c.l.b16 %v45
    %v73 = vunpack.c.l.b16 %v46
    %v74 = vunpack.c.l.b16 %v47
    %v75 = vunpack.c.l.b16 %v48
    %v76 = vpack.c.b16 %v69, %v68
    %v77 = vpack.c.b16 %v71, %v70
    %v78 = vpack.c.b16 %v73, %v72
    %v79 = vpack.c.b16 %v75, %v74
    %v84 = vunpack.c.l.b16 %v49
    %v85 = vunpack.c.l.b16 %v50
    %v86 = vunpack.c.l.b16 %v51
    %v87 = vunpack.c.l.b16 %v52
    %v88 = vpack.c.b16 %v85, %v84
    %v89 = vpack.c.b16 %v87, %v86
    %vm92 = vcmask 261120
    %v94 = vsel %vm92, %v76, 0
    %v97 = vsel %vm92, %v77, 0
    %v100 = vsel %vm92, %v78, 0
    %v103 = vsel %vm92, %v79, 0
    %105 = vmatprep.subr.bf16.mxu0 0
    %106 = vmatpush1.bf16.msra.mxu0 0
    %107 = vmatprep.subr.bf16.mxu0 0
    %108 = vmatpush1.bf16.msra.mxu0 0
    %109 = vmatprep.subr.bf16.mxu0 0
    %110 = vmatpush1.bf16.msra.mxu0 0
    %111 = vmatprep.subr.bf16.mxu0 0
    %112 = vmatpush1.bf16.msra.mxu0 0
    %113 = vmatprep.subr.bf16.mxu0 0
    %114 = vmatpush1.bf16.msra.mxu0 0
    %115 = vmatprep.subr.bf16.mxu0 0
    %116 = vmatpush1.bf16.msra.mxu0 0
    %117 = vmatprep.subr.bf16.mxu0 0
    %118 = vmatpush1.bf16.msra.mxu0 %v89
    %119 = vmatprep.subr.bf16.mxu0 0
    %120 = vmatpush1.bf16.msra.mxu0 %v88
    %121 = vmatprep.subr.bf16.mxu0 0
    %122 = vmatpush2.bf16.msra.mxu0 0
    %123 = vmatprep.subr.bf16.mxu0 0
    %124 = vmatpush2.bf16.msra.mxu0 0
    %125 = vmatprep.subr.bf16.mxu0 0
    %126 = vmatpush2.bf16.msra.mxu0 0
    %127 = vmatprep.subr.bf16.mxu0 0
    %128 = vmatpush2.bf16.msra.mxu0 0
    %129 = vmatprep.subr.bf16.mxu0 0
    %130 = vmatpush2.bf16.msra.mxu0 0
    %131 = vmatprep.subr.bf16.mxu0 0
    %132 = vmatpush2.bf16.msra.mxu0 0
    %133 = vmatprep.subr.bf16.mxu0 0
    %134 = vmatpush2.bf16.msra.mxu0 0
    %135 = vmatprep.subr.bf16.mxu0 0
    %136 = vmatpush2.bf16.msra.mxu0 0
    %137 = vmatprep.mubr.bf16.mxu0 0
    %138 = vmatmul.mubr.bf16.gmra.mxu0 %v94
    %v139 = vpop.f32.mrf.mxu0
    %v140 = vadd.f32 %v58, %v139
    %v141 = vpop.f32.mrf.mxu0
    %v142 = vpop.f32.mrf.mxu0
    %v143 = vadd.f32 %v58, %v142
    %v144 = vpop.f32.mrf.mxu0
    %145 = vmatprep.mubr.bf16.mxu0 0
    %146 = vmatmul.mubr.bf16.gmra.mxu0 %v97
    %v147 = vpop.f32.mrf.mxu0
    %v148 = vadd.f32 %v58, %v147
    %v149 = vpop.f32.mrf.mxu0
    %v150 = vpop.f32.mrf.mxu0
    %v151 = vadd.f32 %v58, %v150
    %v152 = vpop.f32.mrf.mxu0
    %153 = vmatprep.mubr.bf16.mxu0 0
    %154 = vmatmul.mubr.bf16.gmra.mxu0 %v100
    %v155 = vpop.f32.mrf.mxu0
    %v156 = vadd.f32 %v58, %v155
    %v157 = vpop.f32.mrf.mxu0
    %v158 = vpop.f32.mrf.mxu0
    %v159 = vadd.f32 %v58, %v158
    %v160 = vpop.f32.mrf.mxu0
    %161 = vmatprep.mubr.bf16.mxu0 0
    %162 = vmatmul.mubr.bf16.gmra.mxu0 %v103
    %v163 = vpop.f32.mrf.mxu0
    %v164 = vadd.f32 %v58, %v163
    %v165 = vpop.f32.mrf.mxu0
    %v166 = vpop.f32.mrf.mxu0
    %v167 = vadd.f32 %v58, %v166
    %v168 = vpop.f32.mrf.mxu0
    %169 = vdwg.mxu0
    %170 = vst [vmem:[#allocation2] sm:$0xff] %v140
    %171 = vst [vmem:[#allocation2 + $0x8] sm:$0xff] %v143
    %172 = vst [vmem:[#allocation2 + $0x10] sm:$0xff] %v148
    %173 = vst [vmem:[#allocation2 + $0x18] sm:$0xff] %v151
    %174 = vst [vmem:[#allocation2 + $0x20] sm:$0xff] %v156
    %175 = vst [vmem:[#allocation2 + $0x28] sm:$0xff] %v159
    %176 = vst [vmem:[#allocation2 + $0x30] sm:$0xff] %v164
    %177 = vst [vmem:[#allocation2 + $0x38] sm:$0xff] %v167
    %v178 = vld [vmem:[%s0] sm:$0xff]
    %v179 = vld [vmem:[%s0 + $0x8] sm:$0xff]
    %v180 = vld [vmem:[%s0 + $0x10] sm:$0xff]
    %v181 = vld [vmem:[%s0 + $0x18] sm:$0xff]
    %v182 = vld [vmem:[%s0 + $0x20] sm:$0xff]
    %v183 = vld [vmem:[%s0 + $0x28] sm:$0xff]
    %v184 = vld [vmem:[%s0 + $0x30] sm:$0xff]
    %v185 = vld [vmem:[%s0 + $0x38] sm:$0xff]
    %vm186 = vcmp.gt.f32.partialorder %v178, 0.0
    %vm187 = vcmp.gt.f32.partialorder %v179, 0.0
    %vm188 = vcmp.gt.f32.partialorder %v180, 0.0
    %vm189 = vcmp.gt.f32.partialorder %v181, 0.0
    %vm190 = vcmp.gt.f32.partialorder %v182, 0.0
    %vm191 = vcmp.gt.f32.partialorder %v183, 0.0
    %vm192 = vcmp.gt.f32.partialorder %v184, 0.0
    %vm193 = vcmp.gt.f32.partialorder %v185, 0.0
    %v194 = vld [vmem:[#allocation2] sm:$0xff]
    %v199 = vunpack.c.l.b16 %v28
    %v200 = vunpack.c.l.b16 %v29
    %v201 = vunpack.c.l.b16 %v30
    %v202 = vunpack.c.l.b16 %v31
    %v203 = vpack.c.b16 %v200, %v199
    %v204 = vpack.c.b16 %v202, %v201
    %v208 = vsel %vm92, 0, 0
    %210 = vmatprep.subr.bf16.mxu0 0
    %211 = vmatpush1.bf16.msra.mxu0 0
    %212 = vmatprep.subr.bf16.mxu0 0
    %213 = vmatpush1.bf16.msra.mxu0 0
    %214 = vmatprep.subr.bf16.mxu0 0
    %215 = vmatpush1.bf16.msra.mxu0 0
    %216 = vmatprep.subr.bf16.mxu0 0
    %217 = vmatpush1.bf16.msra.mxu0 0
    %218 = vmatprep.subr.bf16.mxu0 0
    %219 = vmatpush1.bf16.msra.mxu0 0
    %220 = vmatprep.subr.bf16.mxu0 0
    %221 = vmatpush1.bf16.msra.mxu0 0
    %222 = vmatprep.subr.bf16.mxu0 0
    %223 = vmatpush1.bf16.msra.mxu0 %v204
    %224 = vmatprep.subr.bf16.mxu0 0
    %225 = vmatpush1.bf16.msra.mxu0 %v203
    %226 = vmatprep.subr.bf16.mxu0 0
    %227 = vmatpush2.bf16.msra.mxu0 0
    %228 = vmatprep.subr.bf16.mxu0 0
    %229 = vmatpush2.bf16.msra.mxu0 0
    %230 = vmatprep.subr.bf16.mxu0 0
    %231 = vmatpush2.bf16.msra.mxu0 0
    %232 = vmatprep.subr.bf16.mxu0 0
    %233 = vmatpush2.bf16.msra.mxu0 0
    %234 = vmatprep.subr.bf16.mxu0 0
    %235 = vmatpush2.bf16.msra.mxu0 0
    %236 = vmatprep.subr.bf16.mxu0 0
    %237 = vmatpush2.bf16.msra.mxu0 0
    %238 = vmatprep.subr.bf16.mxu0 0
    %239 = vmatpush2.bf16.msra.mxu0 0
    %240 = vmatprep.subr.bf16.mxu0 0
    %241 = vmatpush2.bf16.msra.mxu0 0
    %242 = vmatprep.mubr.bf16.mxu0 0
    %243 = vmatmul.mubr.bf16.gmra.mxu0 %v208
    %v244 = vpop.f32.mrf.mxu0
    %v245 = vadd.f32 0.0, %v244
    %v246 = vpop.f32.mrf.mxu0
    %v247 = vpop.f32.mrf.mxu0
    %v248 = vpop.f32.mrf.mxu0
    %249 = vdwg.mxu0
    %v250 = vadd.f32 %v194, %v245
    %v251 = vsel %vm186, 1, 0
    %252 = vset.pattern.permute.xlu0 0
    %253 = vperm.xlu0 %252, %v251
    %v254 = vpop.permute.xlu0 %253
    %vm255 = vcmp.eq.s32.totalorder %v254, 1
    %v256 = vxor.u32 %v250, 2147483648
    %v257 = vmul.f32 %v256, 1.442695
    %v258 = vpow.pop %v257
    %v259 = vadd.f32 %v258, 1.0
    %v260 = vrcp.pop %v259
    %v261 = vmul.f32 1.0, %v260
    %v262 = vtanh.pop %v250
    %v263 = vmul.f32 %v261, 0.0
    %265 = vrot.lane.b32.xlu0 %v262, 32
    %v266 = vpop.permute.xlu0 %265
    %v268 = vmul.f32 %v261, %v266
    %270 = vrot.lane.b32.xlu0 %v268, 32
    %v271 = vpop.permute.xlu0 %270
    %v273 = vadd.f32 %v263, %v271
    %v274 = vtanh.pop %v273
    %276 = vrot.lane.b32.xlu0 %v274, 32
    %v277 = vpop.permute.xlu0 %276
    %v279 = vmul.f32 %v261, %v277
    %v280 = vsel %vm255, %v279, 0.0
    %v281 = vsel %vm255, %v273, 0.0
    %283 = vrot.lane.b32.xlu0 %v280, 64
    %v284 = vpop.permute.xlu0 %283
    %v286 = vsel %vm92, %v284, 0.0
    %v287 = vpack.c.bf16 %v286, %v286
    %v289 = vlaneseq
    %v290 = vshrl.u32 %v289, 7
    %v291 = vsub.s32 0, %v290
    %v292 = vrot.slane %v40, %v291
    %v302 = vunpack.c.l.b16 %v32
    %v303 = vunpack.c.l.b16 %v33
    %v304 = vunpack.c.l.b16 %v34
    %v305 = vunpack.c.l.b16 %v35
    %v306 = vunpack.c.l.b16 %v36
    %v307 = vunpack.c.l.b16 %v37
    %v308 = vunpack.c.l.b16 %v38
    %v309 = vunpack.c.l.b16 %v39
    %v310 = vpack.c.b16 %v303, %v302
    %v311 = vpack.c.b16 %v305, %v304
    %v312 = vpack.c.b16 %v307, %v306
    %v313 = vpack.c.b16 %v309, %v308
    %vm318 = vcmask 523264
    %v320 = vsel %vm318, %v287, 0
    %322 = vmatprep.subr.bf16.mxu0 0
    %323 = vmatpush1.bf16.msra.mxu0 0
    %324 = vmatprep.subr.bf16.mxu0 0
    %325 = vmatpush1.bf16.msra.mxu0 0
    %326 = vmatprep.subr.bf16.mxu0 0
    %327 = vmatpush1.bf16.msra.mxu0 0
    %328 = vmatprep.subr.bf16.mxu0 0
    %329 = vmatpush1.bf16.msra.mxu0 0
    %330 = vmatprep.subr.bf16.mxu0 0
    %331 = vmatpush1.bf16.msra.mxu0 %v313
    %332 = vmatprep.subr.bf16.mxu0 0
    %333 = vmatpush1.bf16.msra.mxu0 %v312
    %334 = vmatprep.subr.bf16.mxu0 0
    %335 = vmatpush1.bf16.msra.mxu0 %v311
    %336 = vmatprep.subr.bf16.mxu0 0
    %337 = vmatpush1.bf16.msra.mxu0 %v310
    %338 = vmatprep.subr.bf16.mxu0 0
    %339 = vmatpush2.bf16.msra.mxu0 0
    %340 = vmatprep.subr.bf16.mxu0 0
    %341 = vmatpush2.bf16.msra.mxu0 0
    %342 = vmatprep.subr.bf16.mxu0 0
    %343 = vmatpush2.bf16.msra.mxu0 0
    %344 = vmatprep.subr.bf16.mxu0 0
    %345 = vmatpush2.bf16.msra.mxu0 0
    %346 = vmatprep.subr.bf16.mxu0 0
    %347 = vmatpush2.bf16.msra.mxu0 0
    %348 = vmatprep.subr.bf16.mxu0 0
    %349 = vmatpush2.bf16.msra.mxu0 0
    %350 = vmatprep.subr.bf16.mxu0 0
    %351 = vmatpush2.bf16.msra.mxu0 0
    %352 = vmatprep.subr.bf16.mxu0 0
    %353 = vmatpush2.bf16.msra.mxu0 0
    %354 = vmatprep.mubr.bf16.mxu0 0
    %355 = vmatmul.mubr.bf16.gmra.mxu0 %v320
    %v356 = vpop.f32.mrf.mxu0
    %v357 = vadd.f32 %v292, %v356
    %v358 = vpop.f32.mrf.mxu0
    %v359 = vpop.f32.mrf.mxu0
    %v360 = vpop.f32.mrf.mxu0
    %361 = vdwg.mxu0
    %v362 = vxor.u32 %v357, 2147483648
    %v363 = vmul.f32 %v362, 1.442695
    %v364 = vpow.pop %v363
    %v365 = vadd.f32 %v364, 1.0
    %v366 = vrcp.pop %v365
    %v367 = vmul.f32 1.0, %v366
    %v368 = vtanh.pop %v357
    %v369 = vmul.f32 %v367, 0.0
    %371 = vrot.lane.b32.xlu0 %v368, 32
    %v372 = vpop.permute.xlu0 %371
    %v374 = vmul.f32 %v367, %v372
    %376 = vrot.lane.b32.xlu0 %v374, 32
    %v377 = vpop.permute.xlu0 %376
    %v379 = vadd.f32 %v369, %v377
    %v380 = vtanh.pop %v379
    %382 = vrot.lane.b32.xlu0 %v380, 32
    %v383 = vpop.permute.xlu0 %382
    %v385 = vmul.f32 %v367, %v383
    %v386 = vsel %vm255, %v385, 0.0
    %v387 = vsel %vm255, %v379, 0.0
    %v388 = vld [vmem:[#allocation2 + $0x8] sm:$0xff]
    %v389 = vpack.c.bf16 %v280, %v280
    %391 = vrot.lane.b32.xlu0 %v389, 64
    %v392 = vpop.permute.xlu0 %391
    %v394 = vsel %vm92, %v392, 0
    %396 = vmatprep.subr.bf16.mxu0 0
    %397 = vmatpush1.bf16.msra.mxu0 0
    %398 = vmatprep.subr.bf16.mxu0 0
    %399 = vmatpush1.bf16.msra.mxu0 0
    %400 = vmatprep.subr.bf16.mxu0 0
    %401 = vmatpush1.bf16.msra.mxu0 0
    %402 = vmatprep.subr.bf16.mxu0 0
    %403 = vmatpush1.bf16.msra.mxu0 0
    %404 = vmatprep.subr.bf16.mxu0 0
    %405 = vmatpush1.bf16.msra.mxu0 0
    %406 = vmatprep.subr.bf16.mxu0 0
    %407 = vmatpush1.bf16.msra.mxu0 0
    %408 = vmatprep.subr.bf16.mxu0 0
    %409 = vmatpush1.bf16.msra.mxu0 %v204
    %410 = vmatprep.subr.bf16.mxu0 0
    %411 = vmatpush1.bf16.msra.mxu0 %v203
    %412 = vmatprep.subr.bf16.mxu0 0
    %413 = vmatpush2.bf16.msra.mxu0 0
    %414 = vmatprep.subr.bf16.mxu0 0
    %415 = vmatpush2.bf16.msra.mxu0 0
    %416 = vmatprep.subr.bf16.mxu0 0
    %417 = vmatpush2.bf16.msra.mxu0 0
    %418 = vmatprep.subr.bf16.mxu0 0
    %419 = vmatpush2.bf16.msra.mxu0 0
    %420 = vmatprep.subr.bf16.mxu0 0
    %421 = vmatpush2.bf16.msra.mxu0 0
    %422 = vmatprep.subr.bf16.mxu0 0
    %423 = vmatpush2.bf16.msra.mxu0 0
    %424 = vmatprep.subr.bf16.mxu0 0
    %425 = vmatpush2.bf16.msra.mxu0 0
    %426 = vmatprep.subr.bf16.mxu0 0
    %427 = vmatpush2.bf16.msra.mxu0 0
    %428 = vmatprep.mubr.bf16.mxu0 0
    %429 = vmatmul.mubr.bf16.gmra.mxu0 %v394
    %v430 = vpop.f32.mrf.mxu0
    %v431 = vadd.f32 0.0, %v430
    %v432 = vpop.f32.mrf.mxu0
    %v433 = vpop.f32.mrf.mxu0
    %v434 = vpop.f32.mrf.mxu0
    %435 = vdwg.mxu0
    %v436 = vadd.f32 %v388, %v431
    %v437 = vsel %vm187, 1, 0
    %438 = vset.pattern.permute.xlu0 0
    %439 = vperm.xlu0 %438, %v437
    %v440 = vpop.permute.xlu0 %439
    %vm441 = vcmp.eq.s32.totalorder %v440, 1
    %v442 = vxor.u32 %v436, 2147483648
    %v443 = vmul.f32 %v442, 1.442695
    %v444 = vpow.pop %v443
    %v445 = vadd.f32 %v444, 1.0
    %v446 = vrcp.pop %v445
    %v447 = vmul.f32 1.0, %v446
    %v448 = vtanh.pop %v436
    %v449 = vmul.f32 %v447, %v281
    %451 = vrot.lane.b32.xlu0 %v448, 32
    %v452 = vpop.permute.xlu0 %451
    %v454 = vmul.f32 %v447, %v452
    %456 = vrot.lane.b32.xlu0 %v454, 32
    %v457 = vpop.permute.xlu0 %456
    %v459 = vadd.f32 %v449, %v457
    %v460 = vtanh.pop %v459
    %462 = vrot.lane.b32.xlu0 %v460, 32
    %v463 = vpop.permute.xlu0 %462
    %v465 = vmul.f32 %v447, %v463
    %v466 = vsel %vm441, %v465, %v280
    %v467 = vsel %vm441, %v459, %v281
    %469 = vrot.lane.b32.xlu0 %v466, 64
    %v470 = vpop.permute.xlu0 %469
    %473 = vrot.lane.b32.xlu0 %v386, 96
    %v474 = vpop.permute.xlu0 %473
    %v476 = vsel %vm92, %v470, %v474
    %v477 = vpack.c.bf16 %v476, %v476
    %v479 = vsel %vm318, %v477, 0
    %481 = vmatprep.subr.bf16.mxu0 0
    %482 = vmatpush1.bf16.msra.mxu0 0
    %483 = vmatprep.subr.bf16.mxu0 0
    %484 = vmatpush1.bf16.msra.mxu0 0
    %485 = vmatprep.subr.bf16.mxu0 0
    %486 = vmatpush1.bf16.msra.mxu0 0
    %487 = vmatprep.subr.bf16.mxu0 0
    %488 = vmatpush1.bf16.msra.mxu0 0
    %489 = vmatprep.subr.bf16.mxu0 0
    %490 = vmatpush1.bf16.msra.mxu0 %v313
    %491 = vmatprep.subr.bf16.mxu0 0
    %492 = vmatpush1.bf16.msra.mxu0 %v312
    %493 = vmatprep.subr.bf16.mxu0 0
    %494 = vmatpush1.bf16.msra.mxu0 %v311
    %495 = vmatprep.subr.bf16.mxu0 0
    %496 = vmatpush1.bf16.msra.mxu0 %v310
    %497 = vmatprep.subr.bf16.mxu0 0
    %498 = vmatpush2.bf16.msra.mxu0 0
    %499 = vmatprep.subr.bf16.mxu0 0
    %500 = vmatpush2.bf16.msra.mxu0 0
    %501 = vmatprep.subr.bf16.mxu0 0
    %502 = vmatpush2.bf16.msra.mxu0 0
    %503 = vmatprep.subr.bf16.mxu0 0
    %504 = vmatpush2.bf16.msra.mxu0 0
    %505 = vmatprep.subr.bf16.mxu0 0
    %506 = vmatpush2.bf16.msra.mxu0 0
    %507 = vmatprep.subr.bf16.mxu0 0
    %508 = vmatpush2.bf16.msra.mxu0 0
    %509 = vmatprep.subr.bf16.mxu0 0
    %510 = vmatpush2.bf16.msra.mxu0 0
    %511 = vmatprep.subr.bf16.mxu0 0
    %512 = vmatpush2.bf16.msra.mxu0 0
    %513 = vmatprep.mubr.bf16.mxu0 0
    %514 = vmatmul.mubr.bf16.gmra.mxu0 %v479
    %v515 = vpop.f32.mrf.mxu0
    %v516 = vadd.f32 %v292, %v515
    %v517 = vpop.f32.mrf.mxu0
    %v518 = vpop.f32.mrf.mxu0
    %v519 = vpop.f32.mrf.mxu0
    %520 = vdwg.mxu0
    %v521 = vxor.u32 %v516, 2147483648
    %v522 = vmul.f32 %v521, 1.442695
    %v523 = vpow.pop %v522
    %v524 = vadd.f32 %v523, 1.0
    %v525 = vrcp.pop %v524
    %v526 = vmul.f32 1.0, %v525
    %v527 = vtanh.pop %v516
    %v528 = vmul.f32 %v526, %v387
    %530 = vrot.lane.b32.xlu0 %v527, 32
    %v531 = vpop.permute.xlu0 %530
    %v533 = vmul.f32 %v526, %v531
    %535 = vrot.lane.b32.xlu0 %v533, 32
    %v536 = vpop.permute.xlu0 %535
    %v538 = vadd.f32 %v528, %v536
    %v539 = vtanh.pop %v538
    %541 = vrot.lane.b32.xlu0 %v539, 32
    %v542 = vpop.permute.xlu0 %541
    %v544 = vmul.f32 %v526, %v542
    %v545 = vsel %vm441, %v544, %v386
    %v546 = vsel %vm441, %v538, %v387
    %v547 = vld [vmem:[#allocation2 + $0x10] sm:$0xff]
    %v548 = vpack.c.bf16 %v466, %v466
    %550 = vrot.lane.b32.xlu0 %v548, 64
    %v551 = vpop.permute.xlu0 %550
    %v553 = vsel %vm92, %v551, 0
    %555 = vmatprep.subr.bf16.mxu0 0
    %556 = vmatpush1.bf16.msra.mxu0 0
    %557 = vmatprep.subr.bf16.mxu0 0
    %558 = vmatpush1.bf16.msra.mxu0 0
    %559 = vmatprep.subr.bf16.mxu0 0
    %560 = vmatpush1.bf16.msra.mxu0 0
    %561 = vmatprep.subr.bf16.mxu0 0
    %562 = vmatpush1.bf16.msra.mxu0 0
    %563 = vmatprep.subr.bf16.mxu0 0
    %564 = vmatpush1.bf16.msra.mxu0 0
    %565 = vmatprep.subr.bf16.mxu0 0
    %566 = vmatpush1.bf16.msra.mxu0 0
    %567 = vmatprep.subr.bf16.mxu0 0
    %568 = vmatpush1.bf16.msra.mxu0 %v204
    %569 = vmatprep.subr.bf16.mxu0 0
    %570 = vmatpush1.bf16.msra.mxu0 %v203
    %571 = vmatprep.subr.bf16.mxu0 0
    %572 = vmatpush2.bf16.msra.mxu0 0
    %573 = vmatprep.subr.bf16.mxu0 0
    %574 = vmatpush2.bf16.msra.mxu0 0
    %575 = vmatprep.subr.bf16.mxu0 0
    %576 = vmatpush2.bf16.msra.mxu0 0
    %577 = vmatprep.subr.bf16.mxu0 0
    %578 = vmatpush2.bf16.msra.mxu0 0
    %579 = vmatprep.subr.bf16.mxu0 0
    %580 = vmatpush2.bf16.msra.mxu0 0
    %581 = vmatprep.subr.bf16.mxu0 0
    %582 = vmatpush2.bf16.msra.mxu0 0
    %583 = vmatprep.subr.bf16.mxu0 0
    %584 = vmatpush2.bf16.msra.mxu0 0
    %585 = vmatprep.subr.bf16.mxu0 0
    %586 = vmatpush2.bf16.msra.mxu0 0
    %587 = vmatprep.mubr.bf16.mxu0 0
    %588 = vmatmul.mubr.bf16.gmra.mxu0 %v553
    %v589 = vpop.f32.mrf.mxu0
    %v590 = vadd.f32 0.0, %v589
    %v591 = vpop.f32.mrf.mxu0
    %v592 = vpop.f32.mrf.mxu0
    %v593 = vpop.f32.mrf.mxu0
    %594 = vdwg.mxu0
    %v595 = vadd.f32 %v547, %v590
    %v596 = vsel %vm188, 1, 0
    %597 = vset.pattern.permute.xlu0 0
    %598 = vperm.xlu0 %597, %v596
    %v599 = vpop.permute.xlu0 %598
    %vm600 = vcmp.eq.s32.totalorder %v599, 1
    %v601 = vxor.u32 %v595, 2147483648
    %v602 = vmul.f32 %v601, 1.442695
    %v603 = vpow.pop %v602
    %v604 = vadd.f32 %v603, 1.0
    %v605 = vrcp.pop %v604
    %v606 = vmul.f32 1.0, %v605
    %v607 = vtanh.pop %v595
    %v608 = vmul.f32 %v606, %v467
    %610 = vrot.lane.b32.xlu0 %v607, 32
    %v611 = vpop.permute.xlu0 %610
    %v613 = vmul.f32 %v606, %v611
    %615 = vrot.lane.b32.xlu0 %v613, 32
    %v616 = vpop.permute.xlu0 %615
    %v618 = vadd.f32 %v608, %v616
    %v619 = vtanh.pop %v618
    %621 = vrot.lane.b32.xlu0 %v619, 32
    %v622 = vpop.permute.xlu0 %621
    %v624 = vmul.f32 %v606, %v622
    %v625 = vsel %vm600, %v624, %v466
    %v626 = vsel %vm600, %v618, %v467
    %628 = vrot.lane.b32.xlu0 %v625, 64
    %v629 = vpop.permute.xlu0 %628
    %632 = vrot.lane.b32.xlu0 %v545, 96
    %v633 = vpop.permute.xlu0 %632
    %v635 = vsel %vm92, %v629, %v633
    %v636 = vpack.c.bf16 %v635, %v635
    %v638 = vsel %vm318, %v636, 0
    %640 = vmatprep.subr.bf16.mxu0 0
    %641 = vmatpush1.bf16.msra.mxu0 0
    %642 = vmatprep.subr.bf16.mxu0 0
    %643 = vmatpush1.bf16.msra.mxu0 0
    %644 = vmatprep.subr.bf16.mxu0 0
    %645 = vmatpush1.bf16.msra.mxu0 0
    %646 = vmatprep.subr.bf16.mxu0 0
    %647 = vmatpush1.bf16.msra.mxu0 0
    %648 = vmatprep.subr.bf16.mxu0 0
    %649 = vmatpush1.bf16.msra.mxu0 %v313
    %650 = vmatprep.subr.bf16.mxu0 0
    %651 = vmatpush1.bf16.msra.mxu0 %v312
    %652 = vmatprep.subr.bf16.mxu0 0
    %653 = vmatpush1.bf16.msra.mxu0 %v311
    %654 = vmatprep.subr.bf16.mxu0 0
    %655 = vmatpush1.bf16.msra.mxu0 %v310
    %656 = vmatprep.subr.bf16.mxu0 0
    %657 = vmatpush2.bf16.msra.mxu0 0
    %658 = vmatprep.subr.bf16.mxu0 0
    %659 = vmatpush2.bf16.msra.mxu0 0
    %660 = vmatprep.subr.bf16.mxu0 0
    %661 = vmatpush2.bf16.msra.mxu0 0
    %662 = vmatprep.subr.bf16.mxu0 0
    %663 = vmatpush2.bf16.msra.mxu0 0
    %664 = vmatprep.subr.bf16.mxu0 0
    %665 = vmatpush2.bf16.msra.mxu0 0
    %666 = vmatprep.subr.bf16.mxu0 0
    %667 = vmatpush2.bf16.msra.mxu0 0
    %668 = vmatprep.subr.bf16.mxu0 0
    %669 = vmatpush2.bf16.msra.mxu0 0
    %670 = vmatprep.subr.bf16.mxu0 0
    %671 = vmatpush2.bf16.msra.mxu0 0
    %672 = vmatprep.mubr.bf16.mxu0 0
    %673 = vmatmul.mubr.bf16.gmra.mxu0 %v638
    %v674 = vpop.f32.mrf.mxu0
    %v675 = vadd.f32 %v292, %v674
    %v676 = vpop.f32.mrf.mxu0
    %v677 = vpop.f32.mrf.mxu0
    %v678 = vpop.f32.mrf.mxu0
    %679 = vdwg.mxu0
    %v680 = vxor.u32 %v675, 2147483648
    %v681 = vmul.f32 %v680, 1.442695
    %v682 = vpow.pop %v681
    %v683 = vadd.f32 %v682, 1.0
    %v684 = vrcp.pop %v683
    %v685 = vmul.f32 1.0, %v684
    %v686 = vtanh.pop %v675
    %v687 = vmul.f32 %v685, %v546
    %689 = vrot.lane.b32.xlu0 %v686, 32
    %v690 = vpop.permute.xlu0 %689
    %v692 = vmul.f32 %v685, %v690
    %694 = vrot.lane.b32.xlu0 %v692, 32
    %v695 = vpop.permute.xlu0 %694
    %v697 = vadd.f32 %v687, %v695
    %v698 = vtanh.pop %v697
    %700 = vrot.lane.b32.xlu0 %v698, 32
    %v701 = vpop.permute.xlu0 %700
    %v703 = vmul.f32 %v685, %v701
    %v704 = vsel %vm600, %v703, %v545
    %v705 = vsel %vm600, %v697, %v546
    %v706 = vld [vmem:[#allocation2 + $0x18] sm:$0xff]
    %v707 = vpack.c.bf16 %v625, %v625
    %709 = vrot.lane.b32.xlu0 %v707, 64
    %v710 = vpop.permute.xlu0 %709
    %v712 = vsel %vm92, %v710, 0
    %714 = vmatprep.subr.bf16.mxu0 0
    %715 = vmatpush1.bf16.msra.mxu0 0
    %716 = vmatprep.subr.bf16.mxu0 0
    %717 = vmatpush1.bf16.msra.mxu0 0
    %718 = vmatprep.subr.bf16.mxu0 0
    %719 = vmatpush1.bf16.msra.mxu0 0
    %720 = vmatprep.subr.bf16.mxu0 0
    %721 = vmatpush1.bf16.msra.mxu0 0
    %722 = vmatprep.subr.bf16.mxu0 0
    %723 = vmatpush1.bf16.msra.mxu0 0
    %724 = vmatprep.subr.bf16.mxu0 0
    %725 = vmatpush1.bf16.msra.mxu0 0
    %726 = vmatprep.subr.bf16.mxu0 0
    %727 = vmatpush1.bf16.msra.mxu0 %v204
    %728 = vmatprep.subr.bf16.mxu0 0
    %729 = vmatpush1.bf16.msra.mxu0 %v203
    %730 = vmatprep.subr.bf16.mxu0 0
    %731 = vmatpush2.bf16.msra.mxu0 0
    %732 = vmatprep.subr.bf16.mxu0 0
    %733 = vmatpush2.bf16.msra.mxu0 0
    %734 = vmatprep.subr.bf16.mxu0 0
    %735 = vmatpush2.bf16.msra.mxu0 0
    %736 = vmatprep.subr.bf16.mxu0 0
    %737 = vmatpush2.bf16.msra.mxu0 0
    %738 = vmatprep.subr.bf16.mxu0 0
    %739 = vmatpush2.bf16.msra.mxu0 0
    %740 = vmatprep.subr.bf16.mxu0 0
    %741 = vmatpush2.bf16.msra.mxu0 0
    %742 = vmatprep.subr.bf16.mxu0 0
    %743 = vmatpush2.bf16.msra.mxu0 0
    %744 = vmatprep.subr.bf16.mxu0 0
    %745 = vmatpush2.bf16.msra.mxu0 0
    %746 = vmatprep.mubr.bf16.mxu0 0
    %747 = vmatmul.mubr.bf16.gmra.mxu0 %v712
    %v748 = vpop.f32.mrf.mxu0
    %v749 = vadd.f32 0.0, %v748
    %v750 = vpop.f32.mrf.mxu0
    %v751 = vpop.f32.mrf.mxu0
    %v752 = vpop.f32.mrf.mxu0
    %753 = vdwg.mxu0
    %v754 = vadd.f32 %v706, %v749
    %v755 = vsel %vm189, 1, 0
    %756 = vset.pattern.permute.xlu0 0
    %757 = vperm.xlu0 %756, %v755
    %v758 = vpop.permute.xlu0 %757
    %vm759 = vcmp.eq.s32.totalorder %v758, 1
    %v760 = vxor.u32 %v754, 2147483648
    %v761 = vmul.f32 %v760, 1.442695
    %v762 = vpow.pop %v761
    %v763 = vadd.f32 %v762, 1.0
    %v764 = vrcp.pop %v763
    %v765 = vmul.f32 1.0, %v764
    %v766 = vtanh.pop %v754
    %v767 = vmul.f32 %v765, %v626
    %769 = vrot.lane.b32.xlu0 %v766, 32
    %v770 = vpop.permute.xlu0 %769
    %v772 = vmul.f32 %v765, %v770
    %774 = vrot.lane.b32.xlu0 %v772, 32
    %v775 = vpop.permute.xlu0 %774
    %v777 = vadd.f32 %v767, %v775
    %v778 = vtanh.pop %v777
    %780 = vrot.lane.b32.xlu0 %v778, 32
    %v781 = vpop.permute.xlu0 %780
    %v783 = vmul.f32 %v765, %v781
    %v784 = vsel %vm759, %v783, %v625
    %v785 = vsel %vm759, %v777, %v626
    %787 = vrot.lane.b32.xlu0 %v784, 64
    %v788 = vpop.permute.xlu0 %787
    %791 = vrot.lane.b32.xlu0 %v704, 96
    %v792 = vpop.permute.xlu0 %791
    %v794 = vsel %vm92, %v788, %v792
    %v795 = vpack.c.bf16 %v794, %v794
    %v797 = vsel %vm318, %v795, 0
    %799 = vmatprep.subr.bf16.mxu0 0
    %800 = vmatpush1.bf16.msra.mxu0 0
    %801 = vmatprep.subr.bf16.mxu0 0
    %802 = vmatpush1.bf16.msra.mxu0 0
    %803 = vmatprep.subr.bf16.mxu0 0
    %804 = vmatpush1.bf16.msra.mxu0 0
    %805 = vmatprep.subr.bf16.mxu0 0
    %806 = vmatpush1.bf16.msra.mxu0 0
    %807 = vmatprep.subr.bf16.mxu0 0
    %808 = vmatpush1.bf16.msra.mxu0 %v313
    %809 = vmatprep.subr.bf16.mxu0 0
    %810 = vmatpush1.bf16.msra.mxu0 %v312
    %811 = vmatprep.subr.bf16.mxu0 0
    %812 = vmatpush1.bf16.msra.mxu0 %v311
    %813 = vmatprep.subr.bf16.mxu0 0
    %814 = vmatpush1.bf16.msra.mxu0 %v310
    %815 = vmatprep.subr.bf16.mxu0 0
    %816 = vmatpush2.bf16.msra.mxu0 0
    %817 = vmatprep.subr.bf16.mxu0 0
    %818 = vmatpush2.bf16.msra.mxu0 0
    %819 = vmatprep.subr.bf16.mxu0 0
    %820 = vmatpush2.bf16.msra.mxu0 0
    %821 = vmatprep.subr.bf16.mxu0 0
    %822 = vmatpush2.bf16.msra.mxu0 0
    %823 = vmatprep.subr.bf16.mxu0 0
    %824 = vmatpush2.bf16.msra.mxu0 0
    %825 = vmatprep.subr.bf16.mxu0 0
    %826 = vmatpush2.bf16.msra.mxu0 0
    %827 = vmatprep.subr.bf16.mxu0 0
    %828 = vmatpush2.bf16.msra.mxu0 0
    %829 = vmatprep.subr.bf16.mxu0 0
    %830 = vmatpush2.bf16.msra.mxu0 0
    %831 = vmatprep.mubr.bf16.mxu0 0
    %832 = vmatmul.mubr.bf16.gmra.mxu0 %v797
    %v833 = vpop.f32.mrf.mxu0
    %v834 = vadd.f32 %v292, %v833
    %v835 = vpop.f32.mrf.mxu0
    %v836 = vpop.f32.mrf.mxu0
    %v837 = vpop.f32.mrf.mxu0
    %838 = vdwg.mxu0
    %v839 = vxor.u32 %v834, 2147483648
    %v840 = vmul.f32 %v839, 1.442695
    %v841 = vpow.pop %v840
    %v842 = vadd.f32 %v841, 1.0
    %v843 = vrcp.pop %v842
    %v844 = vmul.f32 1.0, %v843
    %v845 = vtanh.pop %v834
    %v846 = vmul.f32 %v844, %v705
    %848 = vrot.lane.b32.xlu0 %v845, 32
    %v849 = vpop.permute.xlu0 %848
    %v851 = vmul.f32 %v844, %v849
    %853 = vrot.lane.b32.xlu0 %v851, 32
    %v854 = vpop.permute.xlu0 %853
    %v856 = vadd.f32 %v846, %v854
    %v857 = vtanh.pop %v856
    %859 = vrot.lane.b32.xlu0 %v857, 32
    %v860 = vpop.permute.xlu0 %859
    %v862 = vmul.f32 %v844, %v860
    %v863 = vsel %vm759, %v862, %v704
    %v864 = vsel %vm759, %v856, %v705
    %v865 = vld [vmem:[#allocation2 + $0x20] sm:$0xff]
    %v866 = vpack.c.bf16 %v784, %v784
    %868 = vrot.lane.b32.xlu0 %v866, 64
    %v869 = vpop.permute.xlu0 %868
    %v871 = vsel %vm92, %v869, 0
    %873 = vmatprep.subr.bf16.mxu0 0
    %874 = vmatpush1.bf16.msra.mxu0 0
    %875 = vmatprep.subr.bf16.mxu0 0
    %876 = vmatpush1.bf16.msra.mxu0 0
    %877 = vmatprep.subr.bf16.mxu0 0
    %878 = vmatpush1.bf16.msra.mxu0 0
    %879 = vmatprep.subr.bf16.mxu0 0
    %880 = vmatpush1.bf16.msra.mxu0 0
    %881 = vmatprep.subr.bf16.mxu0 0
    %882 = vmatpush1.bf16.msra.mxu0 0
    %883 = vmatprep.subr.bf16.mxu0 0
    %884 = vmatpush1.bf16.msra.mxu0 0
    %885 = vmatprep.subr.bf16.mxu0 0
    %886 = vmatpush1.bf16.msra.mxu0 %v204
    %887 = vmatprep.subr.bf16.mxu0 0
    %888 = vmatpush1.bf16.msra.mxu0 %v203
    %889 = vmatprep.subr.bf16.mxu0 0
    %890 = vmatpush2.bf16.msra.mxu0 0
    %891 = vmatprep.subr.bf16.mxu0 0
    %892 = vmatpush2.bf16.msra.mxu0 0
    %893 = vmatprep.subr.bf16.mxu0 0
    %894 = vmatpush2.bf16.msra.mxu0 0
    %895 = vmatprep.subr.bf16.mxu0 0
    %896 = vmatpush2.bf16.msra.mxu0 0
    %897 = vmatprep.subr.bf16.mxu0 0
    %898 = vmatpush2.bf16.msra.mxu0 0
    %899 = vmatprep.subr.bf16.mxu0 0
    %900 = vmatpush2.bf16.msra.mxu0 0
    %901 = vmatprep.subr.bf16.mxu0 0
    %902 = vmatpush2.bf16.msra.mxu0 0
    %903 = vmatprep.subr.bf16.mxu0 0
    %904 = vmatpush2.bf16.msra.mxu0 0
    %905 = vmatprep.mubr.bf16.mxu0 0
    %906 = vmatmul.mubr.bf16.gmra.mxu0 %v871
    %v907 = vpop.f32.mrf.mxu0
    %v908 = vadd.f32 0.0, %v907
    %v909 = vpop.f32.mrf.mxu0
    %v910 = vpop.f32.mrf.mxu0
    %v911 = vpop.f32.mrf.mxu0
    %912 = vdwg.mxu0
    %v913 = vadd.f32 %v865, %v908
    %v914 = vsel %vm190, 1, 0
    %915 = vset.pattern.permute.xlu0 0
    %916 = vperm.xlu0 %915, %v914
    %v917 = vpop.permute.xlu0 %916
    %vm918 = vcmp.eq.s32.totalorder %v917, 1
    %v919 = vxor.u32 %v913, 2147483648
    %v920 = vmul.f32 %v919, 1.442695
    %v921 = vpow.pop %v920
    %v922 = vadd.f32 %v921, 1.0
    %v923 = vrcp.pop %v922
    %v924 = vmul.f32 1.0, %v923
    %v925 = vtanh.pop %v913
    %v926 = vmul.f32 %v924, %v785
    %928 = vrot.lane.b32.xlu0 %v925, 32
    %v929 = vpop.permute.xlu0 %928
    %v931 = vmul.f32 %v924, %v929
    %933 = vrot.lane.b32.xlu0 %v931, 32
    %v934 = vpop.permute.xlu0 %933
    %v936 = vadd.f32 %v926, %v934
    %v937 = vtanh.pop %v936
    %939 = vrot.lane.b32.xlu0 %v937, 32
    %v940 = vpop.permute.xlu0 %939
    %v942 = vmul.f32 %v924, %v940
    %v943 = vsel %vm918, %v942, %v784
    %v944 = vsel %vm918, %v936, %v785
    %946 = vrot.lane.b32.xlu0 %v943, 64
    %v947 = vpop.permute.xlu0 %946
    %950 = vrot.lane.b32.xlu0 %v863, 96
    %v951 = vpop.permute.xlu0 %950
    %v953 = vsel %vm92, %v947, %v951
    %v954 = vpack.c.bf16 %v953, %v953
    %v956 = vsel %vm318, %v954, 0
    %958 = vmatprep.subr.bf16.mxu0 0
    %959 = vmatpush1.bf16.msra.mxu0 0
    %960 = vmatprep.subr.bf16.mxu0 0
    %961 = vmatpush1.bf16.msra.mxu0 0
    %962 = vmatprep.subr.bf16.mxu0 0
    %963 = vmatpush1.bf16.msra.mxu0 0
    %964 = vmatprep.subr.bf16.mxu0 0
    %965 = vmatpush1.bf16.msra.mxu0 0
    %966 = vmatprep.subr.bf16.mxu0 0
    %967 = vmatpush1.bf16.msra.mxu0 %v313
    %968 = vmatprep.subr.bf16.mxu0 0
    %969 = vmatpush1.bf16.msra.mxu0 %v312
    %970 = vmatprep.subr.bf16.mxu0 0
    %971 = vmatpush1.bf16.msra.mxu0 %v311
    %972 = vmatprep.subr.bf16.mxu0 0
    %973 = vmatpush1.bf16.msra.mxu0 %v310
    %974 = vmatprep.subr.bf16.mxu0 0
    %975 = vmatpush2.bf16.msra.mxu0 0
    %976 = vmatprep.subr.bf16.mxu0 0
    %977 = vmatpush2.bf16.msra.mxu0 0
    %978 = vmatprep.subr.bf16.mxu0 0
    %979 = vmatpush2.bf16.msra.mxu0 0
    %980 = vmatprep.subr.bf16.mxu0 0
    %981 = vmatpush2.bf16.msra.mxu0 0
    %982 = vmatprep.subr.bf16.mxu0 0
    %983 = vmatpush2.bf16.msra.mxu0 0
    %984 = vmatprep.subr.bf16.mxu0 0
    %985 = vmatpush2.bf16.msra.mxu0 0
    %986 = vmatprep.subr.bf16.mxu0 0
    %987 = vmatpush2.bf16.msra.mxu0 0
    %988 = vmatprep.subr.bf16.mxu0 0
    %989 = vmatpush2.bf16.msra.mxu0 0
    %990 = vmatprep.mubr.bf16.mxu0 0
    %991 = vmatmul.mubr.bf16.gmra.mxu0 %v956
    %v992 = vpop.f32.mrf.mxu0
    %v993 = vadd.f32 %v292, %v992
    %v994 = vpop.f32.mrf.mxu0
    %v995 = vpop.f32.mrf.mxu0
    %v996 = vpop.f32.mrf.mxu0
    %997 = vdwg.mxu0
    %v998 = vxor.u32 %v993, 2147483648
    %v999 = vmul.f32 %v998, 1.442695
    %v1000 = vpow.pop %v999
    %v1001 = vadd.f32 %v1000, 1.0
    %v1002 = vrcp.pop %v1001
    %v1003 = vmul.f32 1.0, %v1002
    %v1004 = vtanh.pop %v993
    %v1005 = vmul.f32 %v1003, %v864
    %1007 = vrot.lane.b32.xlu0 %v1004, 32
    %v1008 = vpop.permute.xlu0 %1007
    %v1010 = vmul.f32 %v1003, %v1008
    %1012 = vrot.lane.b32.xlu0 %v1010, 32
    %v1013 = vpop.permute.xlu0 %1012
    %v1015 = vadd.f32 %v1005, %v1013
    %v1016 = vtanh.pop %v1015
    %1018 = vrot.lane.b32.xlu0 %v1016, 32
    %v1019 = vpop.permute.xlu0 %1018
    %v1021 = vmul.f32 %v1003, %v1019
    %v1022 = vsel %vm918, %v1021, %v863
    %v1023 = vsel %vm918, %v1015, %v864
    %v1024 = vld [vmem:[#allocation2 + $0x28] sm:$0xff]
    %v1025 = vpack.c.bf16 %v943, %v943
    %1027 = vrot.lane.b32.xlu0 %v1025, 64
    %v1028 = vpop.permute.xlu0 %1027
    %v1030 = vsel %vm92, %v1028, 0
    %1032 = vmatprep.subr.bf16.mxu0 0
    %1033 = vmatpush1.bf16.msra.mxu0 0
    %1034 = vmatprep.subr.bf16.mxu0 0
    %1035 = vmatpush1.bf16.msra.mxu0 0
    %1036 = vmatprep.subr.bf16.mxu0 0
    %1037 = vmatpush1.bf16.msra.mxu0 0
    %1038 = vmatprep.subr.bf16.mxu0 0
    %1039 = vmatpush1.bf16.msra.mxu0 0
    %1040 = vmatprep.subr.bf16.mxu0 0
    %1041 = vmatpush1.bf16.msra.mxu0 0
    %1042 = vmatprep.subr.bf16.mxu0 0
    %1043 = vmatpush1.bf16.msra.mxu0 0
    %1044 = vmatprep.subr.bf16.mxu0 0
    %1045 = vmatpush1.bf16.msra.mxu0 %v204
    %1046 = vmatprep.subr.bf16.mxu0 0
    %1047 = vmatpush1.bf16.msra.mxu0 %v203
    %1048 = vmatprep.subr.bf16.mxu0 0
    %1049 = vmatpush2.bf16.msra.mxu0 0
    %1050 = vmatprep.subr.bf16.mxu0 0
    %1051 = vmatpush2.bf16.msra.mxu0 0
    %1052 = vmatprep.subr.bf16.mxu0 0
    %1053 = vmatpush2.bf16.msra.mxu0 0
    %1054 = vmatprep.subr.bf16.mxu0 0
    %1055 = vmatpush2.bf16.msra.mxu0 0
    %1056 = vmatprep.subr.bf16.mxu0 0
    %1057 = vmatpush2.bf16.msra.mxu0 0
    %1058 = vmatprep.subr.bf16.mxu0 0
    %1059 = vmatpush2.bf16.msra.mxu0 0
    %1060 = vmatprep.subr.bf16.mxu0 0
    %1061 = vmatpush2.bf16.msra.mxu0 0
    %1062 = vmatprep.subr.bf16.mxu0 0
    %1063 = vmatpush2.bf16.msra.mxu0 0
    %1064 = vmatprep.mubr.bf16.mxu0 0
    %1065 = vmatmul.mubr.bf16.gmra.mxu0 %v1030
    %v1066 = vpop.f32.mrf.mxu0
    %v1067 = vadd.f32 0.0, %v1066
    %v1068 = vpop.f32.mrf.mxu0
    %v1069 = vpop.f32.mrf.mxu0
    %v1070 = vpop.f32.mrf.mxu0
    %1071 = vdwg.mxu0
    %v1072 = vadd.f32 %v1024, %v1067
    %v1073 = vsel %vm191, 1, 0
    %1074 = vset.pattern.permute.xlu0 0
    %1075 = vperm.xlu0 %1074, %v1073
    %v1076 = vpop.permute.xlu0 %1075
    %vm1077 = vcmp.eq.s32.totalorder %v1076, 1
    %v1078 = vxor.u32 %v1072, 2147483648
    %v1079 = vmul.f32 %v1078, 1.442695
    %v1080 = vpow.pop %v1079
    %v1081 = vadd.f32 %v1080, 1.0
    %v1082 = vrcp.pop %v1081
    %v1083 = vmul.f32 1.0, %v1082
    %v1084 = vtanh.pop %v1072
    %v1085 = vmul.f32 %v1083, %v944
    %1087 = vrot.lane.b32.xlu0 %v1084, 32
    %v1088 = vpop.permute.xlu0 %1087
    %v1090 = vmul.f32 %v1083, %v1088
    %1092 = vrot.lane.b32.xlu0 %v1090, 32
    %v1093 = vpop.permute.xlu0 %1092
    %v1095 = vadd.f32 %v1085, %v1093
    %v1096 = vtanh.pop %v1095
    %1098 = vrot.lane.b32.xlu0 %v1096, 32
    %v1099 = vpop.permute.xlu0 %1098
    %v1101 = vmul.f32 %v1083, %v1099
    %v1102 = vsel %vm1077, %v1101, %v943
    %v1103 = vsel %vm1077, %v1095, %v944
    %1105 = vrot.lane.b32.xlu0 %v1102, 64
    %v1106 = vpop.permute.xlu0 %1105
    %1109 = vrot.lane.b32.xlu0 %v1022, 96
    %v1110 = vpop.permute.xlu0 %1109
    %v1112 = vsel %vm92, %v1106, %v1110
    %v1113 = vpack.c.bf16 %v1112, %v1112
    %v1115 = vsel %vm318, %v1113, 0
    %1117 = vmatprep.subr.bf16.mxu0 0
    %1118 = vmatpush1.bf16.msra.mxu0 0
    %1119 = vmatprep.subr.bf16.mxu0 0
    %1120 = vmatpush1.bf16.msra.mxu0 0
    %1121 = vmatprep.subr.bf16.mxu0 0
    %1122 = vmatpush1.bf16.msra.mxu0 0
    %1123 = vmatprep.subr.bf16.mxu0 0
    %1124 = vmatpush1.bf16.msra.mxu0 0
    %1125 = vmatprep.subr.bf16.mxu0 0
    %1126 = vmatpush1.bf16.msra.mxu0 %v313
    %1127 = vmatprep.subr.bf16.mxu0 0
    %1128 = vmatpush1.bf16.msra.mxu0 %v312
    %1129 = vmatprep.subr.bf16.mxu0 0
    %1130 = vmatpush1.bf16.msra.mxu0 %v311
    %1131 = vmatprep.subr.bf16.mxu0 0
    %1132 = vmatpush1.bf16.msra.mxu0 %v310
    %1133 = vmatprep.subr.bf16.mxu0 0
    %1134 = vmatpush2.bf16.msra.mxu0 0
    %1135 = vmatprep.subr.bf16.mxu0 0
    %1136 = vmatpush2.bf16.msra.mxu0 0
    %1137 = vmatprep.subr.bf16.mxu0 0
    %1138 = vmatpush2.bf16.msra.mxu0 0
    %1139 = vmatprep.subr.bf16.mxu0 0
    %1140 = vmatpush2.bf16.msra.mxu0 0
    %1141 = vmatprep.subr.bf16.mxu0 0
    %1142 = vmatpush2.bf16.msra.mxu0 0
    %1143 = vmatprep.subr.bf16.mxu0 0
    %1144 = vmatpush2.bf16.msra.mxu0 0
    %1145 = vmatprep.subr.bf16.mxu0 0
    %1146 = vmatpush2.bf16.msra.mxu0 0
    %1147 = vmatprep.subr.bf16.mxu0 0
    %1148 = vmatpush2.bf16.msra.mxu0 0
    %1149 = vmatprep.mubr.bf16.mxu0 0
    %1150 = vmatmul.mubr.bf16.gmra.mxu0 %v1115
    %v1151 = vpop.f32.mrf.mxu0
    %v1152 = vadd.f32 %v292, %v1151
    %v1153 = vpop.f32.mrf.mxu0
    %v1154 = vpop.f32.mrf.mxu0
    %v1155 = vpop.f32.mrf.mxu0
    %1156 = vdwg.mxu0
    %v1157 = vxor.u32 %v1152, 2147483648
    %v1158 = vmul.f32 %v1157, 1.442695
    %v1159 = vpow.pop %v1158
    %v1160 = vadd.f32 %v1159, 1.0
    %v1161 = vrcp.pop %v1160
    %v1162 = vmul.f32 1.0, %v1161
    %v1163 = vtanh.pop %v1152
    %v1164 = vmul.f32 %v1162, %v1023
    %1166 = vrot.lane.b32.xlu0 %v1163, 32
    %v1167 = vpop.permute.xlu0 %1166
    %v1169 = vmul.f32 %v1162, %v1167
    %1171 = vrot.lane.b32.xlu0 %v1169, 32
    %v1172 = vpop.permute.xlu0 %1171
    %v1174 = vadd.f32 %v1164, %v1172
    %v1175 = vtanh.pop %v1174
    %1177 = vrot.lane.b32.xlu0 %v1175, 32
    %v1178 = vpop.permute.xlu0 %1177
    %v1180 = vmul.f32 %v1162, %v1178
    %v1181 = vsel %vm1077, %v1180, %v1022
    %v1182 = vsel %vm1077, %v1174, %v1023
    %v1183 = vld [vmem:[#allocation2 + $0x30] sm:$0xff]
    %v1184 = vpack.c.bf16 %v1102, %v1102
    %1186 = vrot.lane.b32.xlu0 %v1184, 64
    %v1187 = vpop.permute.xlu0 %1186
    %v1189 = vsel %vm92, %v1187, 0
    %1191 = vmatprep.subr.bf16.mxu0 0
    %1192 = vmatpush1.bf16.msra.mxu0 0
    %1193 = vmatprep.subr.bf16.mxu0 0
    %1194 = vmatpush1.bf16.msra.mxu0 0
    %1195 = vmatprep.subr.bf16.mxu0 0
    %1196 = vmatpush1.bf16.msra.mxu0 0
    %1197 = vmatprep.subr.bf16.mxu0 0
    %1198 = vmatpush1.bf16.msra.mxu0 0
    %1199 = vmatprep.subr.bf16.mxu0 0
    %1200 = vmatpush1.bf16.msra.mxu0 0
    %1201 = vmatprep.subr.bf16.mxu0 0
    %1202 = vmatpush1.bf16.msra.mxu0 0
    %1203 = vmatprep.subr.bf16.mxu0 0
    %1204 = vmatpush1.bf16.msra.mxu0 %v204
    %1205 = vmatprep.subr.bf16.mxu0 0
    %1206 = vmatpush1.bf16.msra.mxu0 %v203
    %1207 = vmatprep.subr.bf16.mxu0 0
    %1208 = vmatpush2.bf16.msra.mxu0 0
    %1209 = vmatprep.subr.bf16.mxu0 0
    %1210 = vmatpush2.bf16.msra.mxu0 0
    %1211 = vmatprep.subr.bf16.mxu0 0
    %1212 = vmatpush2.bf16.msra.mxu0 0
    %1213 = vmatprep.subr.bf16.mxu0 0
    %1214 = vmatpush2.bf16.msra.mxu0 0
    %1215 = vmatprep.subr.bf16.mxu0 0
    %1216 = vmatpush2.bf16.msra.mxu0 0
    %1217 = vmatprep.subr.bf16.mxu0 0
    %1218 = vmatpush2.bf16.msra.mxu0 0
    %1219 = vmatprep.subr.bf16.mxu0 0
    %1220 = vmatpush2.bf16.msra.mxu0 0
    %1221 = vmatprep.subr.bf16.mxu0 0
    %1222 = vmatpush2.bf16.msra.mxu0 0
    %1223 = vmatprep.mubr.bf16.mxu0 0
    %1224 = vmatmul.mubr.bf16.gmra.mxu0 %v1189
    %v1225 = vpop.f32.mrf.mxu0
    %v1226 = vadd.f32 0.0, %v1225
    %v1227 = vpop.f32.mrf.mxu0
    %v1228 = vpop.f32.mrf.mxu0
    %v1229 = vpop.f32.mrf.mxu0
    %1230 = vdwg.mxu0
    %v1231 = vadd.f32 %v1183, %v1226
    %v1232 = vsel %vm192, 1, 0
    %1233 = vset.pattern.permute.xlu0 0
    %1234 = vperm.xlu0 %1233, %v1232
    %v1235 = vpop.permute.xlu0 %1234
    %vm1236 = vcmp.eq.s32.totalorder %v1235, 1
    %v1237 = vxor.u32 %v1231, 2147483648
    %v1238 = vmul.f32 %v1237, 1.442695
    %v1239 = vpow.pop %v1238
    %v1240 = vadd.f32 %v1239, 1.0
    %v1241 = vrcp.pop %v1240
    %v1242 = vmul.f32 1.0, %v1241
    %v1243 = vtanh.pop %v1231
    %v1244 = vmul.f32 %v1242, %v1103
    %1246 = vrot.lane.b32.xlu0 %v1243, 32
    %v1247 = vpop.permute.xlu0 %1246
    %v1249 = vmul.f32 %v1242, %v1247
    %1251 = vrot.lane.b32.xlu0 %v1249, 32
    %v1252 = vpop.permute.xlu0 %1251
    %v1254 = vadd.f32 %v1244, %v1252
    %v1255 = vtanh.pop %v1254
    %1257 = vrot.lane.b32.xlu0 %v1255, 32
    %v1258 = vpop.permute.xlu0 %1257
    %v1260 = vmul.f32 %v1242, %v1258
    %v1261 = vsel %vm1236, %v1260, %v1102
    %v1262 = vsel %vm1236, %v1254, %v1103
    %1264 = vrot.lane.b32.xlu0 %v1261, 64
    %v1265 = vpop.permute.xlu0 %1264
    %1268 = vrot.lane.b32.xlu0 %v1181, 96
    %v1269 = vpop.permute.xlu0 %1268
    %v1271 = vsel %vm92, %v1265, %v1269
    %v1272 = vpack.c.bf16 %v1271, %v1271
    %v1274 = vsel %vm318, %v1272, 0
    %1276 = vmatprep.subr.bf16.mxu0 0
    %1277 = vmatpush1.bf16.msra.mxu0 0
    %1278 = vmatprep.subr.bf16.mxu0 0
    %1279 = vmatpush1.bf16.msra.mxu0 0
    %1280 = vmatprep.subr.bf16.mxu0 0
    %1281 = vmatpush1.bf16.msra.mxu0 0
    %1282 = vmatprep.subr.bf16.mxu0 0
    %1283 = vmatpush1.bf16.msra.mxu0 0
    %1284 = vmatprep.subr.bf16.mxu0 0
    %1285 = vmatpush1.bf16.msra.mxu0 %v313
    %1286 = vmatprep.subr.bf16.mxu0 0
    %1287 = vmatpush1.bf16.msra.mxu0 %v312
    %1288 = vmatprep.subr.bf16.mxu0 0
    %1289 = vmatpush1.bf16.msra.mxu0 %v311
    %1290 = vmatprep.subr.bf16.mxu0 0
    %1291 = vmatpush1.bf16.msra.mxu0 %v310
    %1292 = vmatprep.subr.bf16.mxu0 0
    %1293 = vmatpush2.bf16.msra.mxu0 0
    %1294 = vmatprep.subr.bf16.mxu0 0
    %1295 = vmatpush2.bf16.msra.mxu0 0
    %1296 = vmatprep.subr.bf16.mxu0 0
    %1297 = vmatpush2.bf16.msra.mxu0 0
    %1298 = vmatprep.subr.bf16.mxu0 0
    %1299 = vmatpush2.bf16.msra.mxu0 0
    %1300 = vmatprep.subr.bf16.mxu0 0
    %1301 = vmatpush2.bf16.msra.mxu0 0
    %1302 = vmatprep.subr.bf16.mxu0 0
    %1303 = vmatpush2.bf16.msra.mxu0 0
    %1304 = vmatprep.subr.bf16.mxu0 0
    %1305 = vmatpush2.bf16.msra.mxu0 0
    %1306 = vmatprep.subr.bf16.mxu0 0
    %1307 = vmatpush2.bf16.msra.mxu0 0
    %1308 = vmatprep.mubr.bf16.mxu0 0
    %1309 = vmatmul.mubr.bf16.gmra.mxu0 %v1274
    %v1310 = vpop.f32.mrf.mxu0
    %v1311 = vadd.f32 %v292, %v1310
    %v1312 = vpop.f32.mrf.mxu0
    %v1313 = vpop.f32.mrf.mxu0
    %v1314 = vpop.f32.mrf.mxu0
    %1315 = vdwg.mxu0
    %v1316 = vxor.u32 %v1311, 2147483648
    %v1317 = vmul.f32 %v1316, 1.442695
    %v1318 = vpow.pop %v1317
    %v1319 = vadd.f32 %v1318, 1.0
    %v1320 = vrcp.pop %v1319
    %v1321 = vmul.f32 1.0, %v1320
    %v1322 = vtanh.pop %v1311
    %v1323 = vmul.f32 %v1321, %v1182
    %1325 = vrot.lane.b32.xlu0 %v1322, 32
    %v1326 = vpop.permute.xlu0 %1325
    %v1328 = vmul.f32 %v1321, %v1326
    %1330 = vrot.lane.b32.xlu0 %v1328, 32
    %v1331 = vpop.permute.xlu0 %1330
    %v1333 = vadd.f32 %v1323, %v1331
    %v1334 = vtanh.pop %v1333
    %1336 = vrot.lane.b32.xlu0 %v1334, 32
    %v1337 = vpop.permute.xlu0 %1336
    %v1339 = vmul.f32 %v1321, %v1337
    %v1340 = vsel %vm1236, %v1339, %v1181
    %v1341 = vsel %vm1236, %v1333, %v1182
    %v1342 = vld [vmem:[#allocation2 + $0x38] sm:$0xff]
    %v1343 = vpack.c.bf16 %v1261, %v1261
    %1345 = vrot.lane.b32.xlu0 %v1343, 64
    %v1346 = vpop.permute.xlu0 %1345
    %v1348 = vsel %vm92, %v1346, 0
    %1350 = vmatprep.subr.bf16.mxu0 0
    %1351 = vmatpush1.bf16.msra.mxu0 0
    %1352 = vmatprep.subr.bf16.mxu0 0
    %1353 = vmatpush1.bf16.msra.mxu0 0
    %1354 = vmatprep.subr.bf16.mxu0 0
    %1355 = vmatpush1.bf16.msra.mxu0 0
    %1356 = vmatprep.subr.bf16.mxu0 0
    %1357 = vmatpush1.bf16.msra.mxu0 0
    %1358 = vmatprep.subr.bf16.mxu0 0
    %1359 = vmatpush1.bf16.msra.mxu0 0
    %1360 = vmatprep.subr.bf16.mxu0 0
    %1361 = vmatpush1.bf16.msra.mxu0 0
    %1362 = vmatprep.subr.bf16.mxu0 0
    %1363 = vmatpush1.bf16.msra.mxu0 %v204
    %1364 = vmatprep.subr.bf16.mxu0 0
    %1365 = vmatpush1.bf16.msra.mxu0 %v203
    %1366 = vmatprep.subr.bf16.mxu0 0
    %1367 = vmatpush2.bf16.msra.mxu0 0
    %1368 = vmatprep.subr.bf16.mxu0 0
    %1369 = vmatpush2.bf16.msra.mxu0 0
    %1370 = vmatprep.subr.bf16.mxu0 0
    %1371 = vmatpush2.bf16.msra.mxu0 0
    %1372 = vmatprep.subr.bf16.mxu0 0
    %1373 = vmatpush2.bf16.msra.mxu0 0
    %1374 = vmatprep.subr.bf16.mxu0 0
    %1375 = vmatpush2.bf16.msra.mxu0 0
    %1376 = vmatprep.subr.bf16.mxu0 0
    %1377 = vmatpush2.bf16.msra.mxu0 0
    %1378 = vmatprep.subr.bf16.mxu0 0
    %1379 = vmatpush2.bf16.msra.mxu0 0
    %1380 = vmatprep.subr.bf16.mxu0 0
    %1381 = vmatpush2.bf16.msra.mxu0 0
    %1382 = vmatprep.mubr.bf16.mxu0 0
    %1383 = vmatmul.mubr.bf16.gmra.mxu0 %v1348
    %v1384 = vpop.f32.mrf.mxu0
    %v1385 = vadd.f32 0.0, %v1384
    %v1386 = vpop.f32.mrf.mxu0
    %v1387 = vpop.f32.mrf.mxu0
    %v1388 = vpop.f32.mrf.mxu0
    %1389 = vdwg.mxu0
    %v1390 = vadd.f32 %v1342, %v1385
    %v1391 = vsel %vm193, 1, 0
    %1392 = vset.pattern.permute.xlu0 0
    %1393 = vperm.xlu0 %1392, %v1391
    %v1394 = vpop.permute.xlu0 %1393
    %vm1395 = vcmp.eq.s32.totalorder %v1394, 1
    %v1396 = vxor.u32 %v1390, 2147483648
    %v1397 = vmul.f32 %v1396, 1.442695
    %v1398 = vpow.pop %v1397
    %v1399 = vadd.f32 %v1398, 1.0
    %v1400 = vrcp.pop %v1399
    %v1401 = vmul.f32 1.0, %v1400
    %v1402 = vtanh.pop %v1390
    %v1403 = vmul.f32 %v1401, %v1262
    %1405 = vrot.lane.b32.xlu0 %v1402, 32
    %v1406 = vpop.permute.xlu0 %1405
    %v1408 = vmul.f32 %v1401, %v1406
    %1410 = vrot.lane.b32.xlu0 %v1408, 32
    %v1411 = vpop.permute.xlu0 %1410
    %v1413 = vadd.f32 %v1403, %v1411
    %v1414 = vtanh.pop %v1413
    %1416 = vrot.lane.b32.xlu0 %v1414, 32
    %v1417 = vpop.permute.xlu0 %1416
    %v1419 = vmul.f32 %v1401, %v1417
    %v1420 = vsel %vm1395, %v1419, %v1261
    %1422 = vrot.lane.b32.xlu0 %v1420, 64
    %v1423 = vpop.permute.xlu0 %1422
    %1426 = vrot.lane.b32.xlu0 %v1340, 96
    %v1427 = vpop.permute.xlu0 %1426
    %v1429 = vsel %vm92, %v1423, %v1427
    %v1430 = vpack.c.bf16 %v1429, %v1429
    %v1432 = vsel %vm318, %v1430, 0
    %1434 = vmatprep.subr.bf16.mxu0 0
    %1435 = vmatpush1.bf16.msra.mxu0 0
    %1436 = vmatprep.subr.bf16.mxu0 0
    %1437 = vmatpush1.bf16.msra.mxu0 0
    %1438 = vmatprep.subr.bf16.mxu0 0
    %1439 = vmatpush1.bf16.msra.mxu0 0
    %1440 = vmatprep.subr.bf16.mxu0 0
    %1441 = vmatpush1.bf16.msra.mxu0 0
    %1442 = vmatprep.subr.bf16.mxu0 0
    %1443 = vmatpush1.bf16.msra.mxu0 %v313
    %1444 = vmatprep.subr.bf16.mxu0 0
    %1445 = vmatpush1.bf16.msra.mxu0 %v312
    %1446 = vmatprep.subr.bf16.mxu0 0
    %1447 = vmatpush1.bf16.msra.mxu0 %v311
    %1448 = vmatprep.subr.bf16.mxu0 0
    %1449 = vmatpush1.bf16.msra.mxu0 %v310
    %1450 = vmatprep.subr.bf16.mxu0 0
    %1451 = vmatpush2.bf16.msra.mxu0 0
    %1452 = vmatprep.subr.bf16.mxu0 0
    %1453 = vmatpush2.bf16.msra.mxu0 0
    %1454 = vmatprep.subr.bf16.mxu0 0
    %1455 = vmatpush2.bf16.msra.mxu0 0
    %1456 = vmatprep.subr.bf16.mxu0 0
    %1457 = vmatpush2.bf16.msra.mxu0 0
    %1458 = vmatprep.subr.bf16.mxu0 0
    %1459 = vmatpush2.bf16.msra.mxu0 0
    %1460 = vmatprep.subr.bf16.mxu0 0
    %1461 = vmatpush2.bf16.msra.mxu0 0
    %1462 = vmatprep.subr.bf16.mxu0 0
    %1463 = vmatpush2.bf16.msra.mxu0 0
    %1464 = vmatprep.subr.bf16.mxu0 0
    %1465 = vmatpush2.bf16.msra.mxu0 0
    %1466 = vmatprep.mubr.bf16.mxu0 0
    %1467 = vmatmul.mubr.bf16.gmra.mxu0 %v1432
    %v1468 = vpop.f32.mrf.mxu0
    %v1469 = vadd.f32 %v292, %v1468
    %v1470 = vpop.f32.mrf.mxu0
    %v1471 = vpop.f32.mrf.mxu0
    %v1472 = vpop.f32.mrf.mxu0
    %1473 = vdwg.mxu0
    %v1474 = vxor.u32 %v1469, 2147483648
    %v1475 = vmul.f32 %v1474, 1.442695
    %v1476 = vpow.pop %v1475
    %v1477 = vadd.f32 %v1476, 1.0
    %v1478 = vrcp.pop %v1477
    %v1479 = vmul.f32 1.0, %v1478
    %v1480 = vtanh.pop %v1469
    %v1481 = vmul.f32 %v1479, %v1341
    %1483 = vrot.lane.b32.xlu0 %v1480, 32
    %v1484 = vpop.permute.xlu0 %1483
    %v1486 = vmul.f32 %v1479, %v1484
    %1488 = vrot.lane.b32.xlu0 %v1486, 32
    %v1489 = vpop.permute.xlu0 %1488
    %v1491 = vadd.f32 %v1481, %v1489
    %v1492 = vtanh.pop %v1491
    %1494 = vrot.lane.b32.xlu0 %v1492, 32
    %v1495 = vpop.permute.xlu0 %1494
    %v1497 = vmul.f32 %v1479, %v1495
    %v1498 = vsel %vm1395, %v1497, %v1340
    %1500 = vrot.lane.b32.xlu0 %v1498, 64
    %v1501 = vpop.permute.xlu0 %1500
    %1503 = vst.msk [vmem:[#allocation3] sm:$0xff] %vm92, %v1501
    // Predicated region
    $region30: #{tpu_custom_call.1} parent=1 // pred_check
      _
    $region31: #{tpu_custom_call.1} parent=1 // pred_check_branch
      %1505 = sbr.rel (0) target = $region33
    $region32: #{tpu_custom_call.1} parent=1 // pred_region
      %s1507 = ssub.s32 128, 128
      %1508 = vsyncadd [#allocation4], %s1507
      %s1510 = sshll.u32 [#allocation3], 4
      %s1511 = int_to_ptr.vmem [resolvable:$true] %s1510
      %1513 = dma.vmem_to_hbm [thread:$0]  %s1511, 128, %s7, [#allocation4]
    $region33: #{tpu_custom_call.1} parent=1 // pred_fallthru
      _
    // Predicated region
    $region34: #{tpu_custom_call.1} parent=1 // pred_check
      _
    $region35: #{tpu_custom_call.1} parent=1 // pred_check_branch
      %1515 = sbr.rel (0) target = $region37
    $region36: #{tpu_custom_call.1} parent=1 // pred_region
      %1516 = dma.done [#allocation4], 128
    $region37: #{tpu_custom_call.1} parent=1 // pred_fallthru
      _
    %1517 = vsyncpa [#allocation4], 1

</llo_original>
